<compile_context>
chip_gen: v7x
topology: tpu7x:2x2x1
jax: 0.10.0
libtpu: 0.0.40
codegen_flags: <defaults>
</compile_context>

<pallas_src>
import numpy as np
import jax
import jax.numpy as jnp
from jax.experimental import pallas as pl
from jax.experimental.pallas import tpu as pltpu

V = 42   # vertices per graph
E = 10   # hyperedges per graph
T = 8    # num_frames hard-coded in HCN.forward (get_hi(N, 8))

# Per-node hyperedge membership, identical to the 42x10 incidence matrix in get_hi.
_NODE_EDGES = [
    (0, 1, 4), (0,), (0,), (0,), (0,),
    (1,), (1,), (1,), (1,),
    (2,), (2,), (2,), (2,),
    (3,), (3,), (3,), (3,),
    (4,), (4,), (4,), (4,),
    (5, 9), (5, 6), (5,), (5,), (5,),
    (6,), (6,), (6,), (6,),
    (7,), (7,), (7,), (7,),
    (8,), (8,), (8,), (8,),
    (9,), (9,), (9,), (9,),
]


def _build_incidence():
    H = np.zeros((V, E), dtype=np.float32)
    for v, edges in enumerate(_NODE_EDGES):
        for e in edges:
            H[v, e] = 1.0
    return H


def build_mixing_matrix():
    """M = D^{-1} H B^{-1} H^T  (42x42), shared by every graph block."""
    H = _build_incidence()
    D = H.sum(axis=1)                      # node degree
    B = H.sum(axis=0)                      # edge degree
    Dinv = np.where(D > 0, 1.0 / D, 0.0)
    Binv = np.where(B > 0, 1.0 / B, 0.0)
    M = (Dinv[:, None] * H) @ (Binv[:, None] * H.T)
    return M.astype(np.float32)


_M_NP = build_mixing_matrix()   # built once at import time (constant)


def _pick_row_block(G):
    """Largest row-block that divides G while keeping >= 2 grid steps (falls back to G)."""
    for gb in (512, 256, 128, 64, 32, 16, 8):
        if G % gb == 0 and G // gb >= 2:
            return gb
    return G


def hcn_kernel(k_ref, b_ref, x_ref, o_ref):
    # k_ref: (Pin, Pout) fused constant kron(M^T, W^T)
    # b_ref: (1, Pout)   bias tiled across vertices
    # x_ref: (GB, Pin)   GB flattened graph rows
    # o_ref: (GB, Pout)
    y = jnp.dot(x_ref[...], k_ref[...], preferred_element_type=jnp.float32)
    o_ref[...] = (y + b_ref[...]).astype(o_ref.dtype)


def hcn_forward(x, w, b):
    """x: (N, T*V, Cin) float32; w: (Cout, Cin); b: (Cout,). Returns (N, T*V, Cout)."""
    N, TV, C = x.shape
    assert TV == T * V, f"expected TV == {T * V}, got {TV}"
    Cout = w.shape[0]
    G = N * T
    Pin, Pout = V * C, V * Cout

    # Pure reshape (no transpose / no copy): one row per graph, channels fastest.
    xg = x.reshape(G, Pin)

    # Fused constant operator: y_row = x_row @ kron(M^T, W^T) + tile(b, V).
    M = jnp.asarray(_M_NP)                                     # (V, V)
    K = jnp.kron(M.T, jnp.asarray(w, jnp.float32).T)           # (Pin, Pout)
    b_row = jnp.tile(jnp.asarray(b, jnp.float32), V).reshape(1, Pout)

    GB = _pick_row_block(G)
    grid = (G // GB,)

    flops = 2 * G * Pin * Pout
    bytes_accessed = 4 * (G * Pin + G * Pout + Pin * Pout + Pout)

    out = pl.pallas_call(
        hcn_kernel,
        out_shape=jax.ShapeDtypeStruct((G, Pout), x.dtype),
        grid_spec=pltpu.PrefetchScalarGridSpec(
            num_scalar_prefetch=0,
            grid=grid,
            in_specs=[
                pl.BlockSpec((Pin, Pout), lambda g: (0, 0)),   # K (constant, resident)
                pl.BlockSpec((1, Pout), lambda g: (0, 0)),     # bias (constant)
                pl.BlockSpec((GB, Pin), lambda g: (g, 0)),     # GB graph rows
            ],
            out_specs=pl.BlockSpec((GB, Pout), lambda g: (g, 0)),
        ),
        compiler_params=pltpu.CompilerParams(
            dimension_semantics=("parallel",),
            vmem_limit_bytes=32 * 1024 * 1024,
        ),
        cost_estimate=pl.CostEstimate(
            flops=int(flops), transcendentals=0, bytes_accessed=int(bytes_accessed)),
    )(K, b_row, xg)

    return out.reshape(N, TV, Cout)


def hcn_reference(x, w, b):
    """Pure-JAX reference of the same math (two structured matmuls)."""
    N, TV, C = x.shape
    M = jnp.asarray(_M_NP)
    xg = x.reshape(N * T, V, C)
    xw = jnp.einsum("gvc,oc->gvo", xg, w)
    y = jnp.einsum("vw,gwo->gvo", M, xw) + b[None, None, :]
    return y.reshape(N, TV, -1)


if __name__ == "__main__":
    key = jax.random.PRNGKey(0)
    N, C = 2, 16                 # in_channels == out_channels (HCN views back to C)
    k_x, k_w, k_b = jax.random.split(key, 3)

    x = jax.random.normal(k_x, (N, T * V, C), dtype=jnp.float32)   # (2, 336, 16)
    w = jax.random.normal(k_w, (C, C), dtype=jnp.float32) * 0.1    # lin.weight (Cout, Cin)
    b = jax.random.normal(k_b, (C,), dtype=jnp.float32) * 0.1      # bias (Cout,)

    y = hcn_forward(x, w, b)
    jax.block_until_ready(y)

    y_ref = hcn_reference(x, w, b)
    assert y.shape == (N, T * V, C)
    np.testing.assert_allclose(np.asarray(y), np.asarray(y_ref), rtol=1e-4, atol=1e-4)

    print("KERNEL_OK")
</pallas_src>

<mosaic_0001>
module attributes {stable_mosaic.version = 11 : i64} {
  func.func @hcn_kernel(%arg0: i32, %arg1: memref<672x672xf32, #tpu.memory_space<vmem>>, %arg2: memref<1x672xf32, #tpu.memory_space<vmem>>, %arg3: memref<8x672xf32, #tpu.memory_space<vmem>>, %arg4: memref<8x672xf32, #tpu.memory_space<vmem>>) attributes {dimension_semantics = [#tpu.dimension_semantics<parallel>], iteration_bounds = array<i64: 2>, scalar_prefetch = 0 : i64, scratch_operands = 0 : i64, tpu.core_type = #tpu.core_type<tc>, window_params = [{pipeline_mode = #tpu.pipeline_mode<synchronous>, transform_indices = @transform_0, window_bounds = array<i64: 672, 672>}, {pipeline_mode = #tpu.pipeline_mode<synchronous>, transform_indices = @transform_1, window_bounds = array<i64: 1, 672>}, {transform_indices = @transform_2, window_bounds = array<i64: 8, 672>}, {transform_indices = @transform_3, window_bounds = array<i64: 8, 672>}]} {
    %c0 = arith.constant 0 : index
    %c0_0 = arith.constant 0 : index
    %0 = vector.load %arg3[%c0, %c0_0] : memref<8x672xf32, #tpu.memory_space<vmem>>, vector<8x672xf32>
    %c0_1 = arith.constant 0 : index
    %c0_2 = arith.constant 0 : index
    %1 = vector.load %arg1[%c0_1, %c0_2] : memref<672x672xf32, #tpu.memory_space<vmem>>, vector<672x672xf32>
    %cst = arith.constant dense<0.000000e+00> : vector<8x672xf32>
    %2 = tpu.matmul %0, %1, %cst {dimension_numbers = #tpu.dot_dimension_numbers<[1], [0], [0], [1], [0, 0, 1, 1], [], []>} : vector<8x672xf32>, vector<672x672xf32>, vector<8x672xf32> -> vector<8x672xf32>
    %c0_3 = arith.constant 0 : index
    %c0_4 = arith.constant 0 : index
    %3 = vector.load %arg2[%c0_3, %c0_4] : memref<1x672xf32, #tpu.memory_space<vmem>>, vector<1x672xf32>
    %4 = vector.broadcast %3 : vector<1x672xf32> to vector<8x672xf32>
    %5 = arith.addf %2, %4 : vector<8x672xf32>
    %c0_5 = arith.constant 0 : index
    %c0_6 = arith.constant 0 : index
    %6 = vector.load %arg4[%c0_5, %c0_6] : memref<8x672xf32, #tpu.memory_space<vmem>>, vector<8x672xf32>
    tpu.vector_store %arg4[%c0_5, %c0_6], %5 {strides = array<i32>} : memref<8x672xf32, #tpu.memory_space<vmem>>, vector<8x672xf32>,
    return
  }
  func.func @transform_0(%arg0: i32) -> (i32, i32) {
    %c0_i32 = arith.constant 0 : i32
    %c0_i32_0 = arith.constant 0 : i32
    %c0_i32_1 = arith.constant 0 : i32
    return %c0_i32, %c0_i32_0 : i32, i32
  }
  func.func @transform_1(%arg0: i32) -> (i32, i32) {
    %c0_i32 = arith.constant 0 : i32
    %c0_i32_0 = arith.constant 0 : i32
    %c0_i32_1 = arith.constant 0 : i32
    return %c0_i32, %c0_i32_0 : i32, i32
  }
  func.func @transform_2(%arg0: i32) -> (i32, i32) {
    %c0_i32 = arith.constant 0 : i32
    %c0_i32_0 = arith.constant 0 : i32
    return %arg0, %c0_i32 : i32, i32
  }
  func.func @transform_3(%arg0: i32) -> (i32, i32) {
    %c0_i32 = arith.constant 0 : i32
    %c0_i32_0 = arith.constant 0 : i32
    return %arg0, %c0_i32 : i32, i32
  }
}

</mosaic_0001>

<llo_original>
// kernel: tpu_custom_call.1
$region0: #{tpu_custom_call.1}
  #allocation0 [shape = 'u32[]', space=smem, size = 0x4, offset = 0x4, fixed_abs, tag = 'smem constant byte address 0x4 - core index']
  #allocation1 [shape = 'u32[144,128]{1,0:T(1,128)}', space=vmem, size = 0x12000, scoped, tag = 'internal scratch']
  %s0 = inlined_call_operand.hbm [shape: f32[672,672], index: 0, kind: input, shape index: {}]
  %s1 = inlined_call_operand.hbm [shape: f32[1,672], index: 1, kind: input, shape index: {}]
  %s2 = inlined_call_operand.hbm [shape: f32[16,672], index: 2, kind: input, shape index: {}]
  %s3 = inlined_call_operand.hbm [shape: f32[16,672], index: 3, kind: output, shape index: {}]
  %s4 = sld [smem:[#allocation0]]
  $region57: #{tpu_custom_call.1} parent=0
    _
  %s6 = ssub.s32 1, %s4
  %s7 = scalar_select 0, %s6, %s4
  $region1: #{tpu_custom_call.1} parent=0
    #allocation2 [shape = 'u8[2064384]{0}', space=vmem, size = 0x1f8000, scoped, tag = 'input window, operand 0, single buffered']
    #allocation3 [shape = 's32[2]{0}', space=sflag, size = 0x8, scoped, tag = 'scoped memory for tpu_custom_call.1']
    #allocation4 [shape = 's32[2]{0}', space=sflag, size = 0x8, scoped, tag = 'scoped memory for tpu_custom_call.1']
    #allocation5 [shape = 'u8[3072]{0}', space=vmem, size = 0xc00, scoped, tag = 'input window, operand 1, single buffered']
    #allocation6 [shape = 's32[1]{0}', space=sflag, size = 0x4, scoped, tag = 'scoped memory for tpu_custom_call.1']
    #allocation7 [shape = 'u8[49152]{0}', space=vmem, size = 0xc000, scoped, tag = 'input window, operand 2']
    #allocation8 [shape = 'u8[49152]{0}', space=vmem, size = 0xc000, scoped, tag = 'output window, operand 0']
    %8 = vsyncpa [#allocation3], 0
    %9 = vsyncpa [#allocation6], 0
    %10 = vsyncpa [#allocation4], 0
    %s11 = scalar_lea.sflag [#allocation4], 1
    %12 = vsyncpa %s11, 0
    loop: start=0, step=1, limit=4
    $region2: #{tpu_custom_call.1} parent=1 // loop_pre_header
      _
    $region3: #{tpu_custom_call.1} parent=1 // loop_header
      %s14 = sphi 0, %s18
      %p15 = scmp.ge.s32.totalorder %s14, 4
      %s22 = sphi 0, %s22
      %s24 = sphi 0, %s22
      %s25 = sphi 0, %s24
      %s39 = sphi 0, %s25
      %s43 = sphi 0, %s43
      %s45 = sphi 0, %s43
      %s46 = sphi 0, %s45
      %s60 = sphi 0, %s46
      %s66 = sphi 0, %s68
      %s69 = sphi 0, %s66
      %s70 = sphi 0, %s69
      %s86 = sphi 0, %s70
      %s92 = sphi 0, %s94
      %s95 = sphi 0, %s92
      %s96 = sphi 0, %s95
      %s112 = sphi 0, %s96
    $region4: #{tpu_custom_call.1} parent=1 // loop_header_branch
      %17 = sbr.rel (%p15) target = $region8
    $region5: #{tpu_custom_call.1} parent=1 // loop_body
      %s19 = ssub.s32 %s14, 1
      %s20 = ssub.s32 %s14, 2
      %s21 = sadd.s32 %s14, 1
      %s23 = sadd.s32 %s22, 1
      %p26 = scmp.eq.s32.totalorder %s14, 1
      %p27 = scmp.ne.s32.totalorder %s22, %s24
      %p28 = scmp.eq.s32.totalorder %s14, 0
      %p29 = por %p27, %p28
      %p30 = scmp.ne.s32.totalorder %s22, %s24
      %p31 = scmp.eq.s32.totalorder %s19, 1
      %p32 = por %p30, %p31
      %p33 = scmp.ne.s32.totalorder %s24, %s25
      %p34 = scmp.eq.s32.totalorder %s19, 0
      %p35 = por %p33, %p34
      %p36 = scmp.ne.s32.totalorder %s24, %s25
      %p37 = scmp.eq.s32.totalorder %s20, 1
      %p38 = por %p36, %p37
      %p40 = scmp.ne.s32.totalorder %s25, %s39
      %p41 = scmp.eq.s32.totalorder %s20, 0
      %p42 = por %p40, %p41
      %s44 = sadd.s32 %s43, 1
      %p47 = scmp.eq.s32.totalorder %s14, 1
      %p48 = scmp.ne.s32.totalorder %s43, %s45
      %p49 = scmp.eq.s32.totalorder %s14, 0
      %p50 = por %p48, %p49
      %p51 = scmp.ne.s32.totalorder %s43, %s45
      %p52 = scmp.eq.s32.totalorder %s19, 1
      %p53 = por %p51, %p52
      %p54 = scmp.ne.s32.totalorder %s45, %s46
      %p55 = scmp.eq.s32.totalorder %s19, 0
      %p56 = por %p54, %p55
      %p57 = scmp.ne.s32.totalorder %s45, %s46
      %p58 = scmp.eq.s32.totalorder %s20, 1
      %p59 = por %p57, %p58
      %p61 = scmp.ne.s32.totalorder %s46, %s60
      %p62 = scmp.eq.s32.totalorder %s20, 0
      %p63 = por %p61, %p62
      %s64 = ssub.s32 %s14, %s21
      %p65 = scmp.eq.s32.totalorder %s64, 0
      %s67 = sadd.s32 %s66, 1
      %s68 = scalar_select %p65, %s66, %s67
      %p71 = pneg %p65
      %p72 = scmp.eq.s32.totalorder %s14, 1
      %p73 = por %p71, %p72
      %p74 = scmp.ne.s32.totalorder %s66, %s69
      %p75 = scmp.eq.s32.totalorder %s14, 0
      %p76 = por %p74, %p75
      %p77 = scmp.ne.s32.totalorder %s66, %s69
      %p78 = scmp.eq.s32.totalorder %s19, 1
      %p79 = por %p77, %p78
      %p80 = scmp.ne.s32.totalorder %s69, %s70
      %p81 = scmp.eq.s32.totalorder %s19, 0
      %p82 = por %p80, %p81
      %p83 = scmp.ne.s32.totalorder %s69, %s70
      %p84 = scmp.eq.s32.totalorder %s20, 1
      %p85 = por %p83, %p84
      %p87 = scmp.ne.s32.totalorder %s70, %s86
      %p88 = scmp.eq.s32.totalorder %s20, 0
      %p89 = por %p87, %p88
      %s90 = ssub.s32 %s14, %s21
      %p91 = scmp.eq.s32.totalorder %s90, 0
      %s93 = sadd.s32 %s92, 1
      %s94 = scalar_select %p91, %s92, %s93
      %p97 = pneg %p91
      %p98 = scmp.eq.s32.totalorder %s14, 1
      %p99 = por %p97, %p98
      %p100 = scmp.ne.s32.totalorder %s92, %s95
      %p101 = scmp.eq.s32.totalorder %s14, 0
      %p102 = por %p100, %p101
      %p103 = scmp.ne.s32.totalorder %s92, %s95
      %p104 = scmp.eq.s32.totalorder %s19, 1
      %p105 = por %p103, %p104
      %p106 = scmp.ne.s32.totalorder %s95, %s96
      %p107 = scmp.eq.s32.totalorder %s19, 0
      %p108 = por %p106, %p107
      %p109 = scmp.ne.s32.totalorder %s95, %s96
      %p110 = scmp.eq.s32.totalorder %s20, 1
      %p111 = por %p109, %p110
      %p113 = scmp.ne.s32.totalorder %s96, %s112
      %p114 = scmp.eq.s32.totalorder %s20, 0
      %p115 = por %p113, %p114
      %p116 = scmp.le.s32.totalorder 1, %s14
      %p117 = scmp.lt.s32.totalorder %s14, 3
      %p118 = pnand %p116, %p117
      %p119 = pneg %p118
      // Predicated region
      $region9: #{tpu_custom_call.1} parent=5 // pred_check
        _
      $region10: #{tpu_custom_call.1} parent=5 // pred_check_branch
        %121 = sbr.rel (%p118) target = $region12
      $region11: #{tpu_custom_call.1} parent=5 // pred_region
        %s122 = ssub.s32 %s14, 1
        // Predicated region
        $region13: #{tpu_custom_call.1} parent=11 // pred_check
          %p123 = pneg %p35
        $region14: #{tpu_custom_call.1} parent=11 // pred_check_branch
          %125 = sbr.rel (%p123) target = $region16
        $region15: #{tpu_custom_call.1} parent=11 // pred_region
          %s127 = ssub.s32 64512, 64512
          %128 = vsyncadd [#allocation3], %s127
          %s129 = sshll.u32 [#allocation2], 4
          %s130 = int_to_ptr.vmem [resolvable:$true] %s129
          %135 = dma.hbm_to_vmem [thread:$0]  %s0, 64512, %s130, [#allocation3], 768, 768, 48
        $region16: #{tpu_custom_call.1} parent=11 // pred_fallthru
          _
        // Predicated region
        $region17: #{tpu_custom_call.1} parent=11 // pred_check
          %p136 = pneg %p56
        $region18: #{tpu_custom_call.1} parent=11 // pred_check_branch
          %138 = sbr.rel (%p136) target = $region20
        $region19: #{tpu_custom_call.1} parent=11 // pred_region
          %s140 = ssub.s32 96, 96
          %141 = vsyncadd [#allocation6], %s140
          %s143 = sshll.u32 [#allocation5], 4
          %s144 = int_to_ptr.vmem [resolvable:$true] %s143
          %146 = dma.hbm_to_vmem [thread:$0]  %s1, 96, %s144, [#allocation6]
        $region20: #{tpu_custom_call.1} parent=11 // pred_fallthru
          _
      $region12: #{tpu_custom_call.1} parent=5 // pred_fallthru
        _
      %p147 = scmp.lt.s32.totalorder %s14, 2
      // Predicated region
      $region21: #{tpu_custom_call.1} parent=5 // pred_check
        %p148 = pneg %p147
      $region22: #{tpu_custom_call.1} parent=5 // pred_check_branch
        %150 = sbr.rel (%p148) target = $region24
      $region23: #{tpu_custom_call.1} parent=5 // pred_region
        // Predicated region
        $region25: #{tpu_custom_call.1} parent=23 // pred_check
          %p151 = pneg %p76
        $region26: #{tpu_custom_call.1} parent=23 // pred_check_branch
          %153 = sbr.rel (%p151) target = $region28
        $region27: #{tpu_custom_call.1} parent=23 // pred_region
          %s154 = sand.u32 %s14, 1
          %s155 = scalar_lea.sflag [#allocation3], %s154
          %s156 = sand.u32 %s66, 1
          %s157 = smul.addr %s156, 48
          %s158 = scalar_lea.vmem [#allocation7], %s157
          %s160 = ssub.s32 768, 768
          %161 = vsyncadd %s155, %s160
          %s162 = smul.addr %s14, 6
          %s163 = smul.addr %s162, 128
          %s164 = scalar_lea.hbm %s2, %s163
          %s166 = sshll.u32 %s158, 4
          %s167 = int_to_ptr.vmem [resolvable:$true] %s166
          %169 = dma.hbm_to_vmem [thread:$0]  %s164, 768, %s167, %s155
        $region28: #{tpu_custom_call.1} parent=23 // pred_fallthru
          _
      $region24: #{tpu_custom_call.1} parent=5 // pred_fallthru
        _
      %p170 = scmp.le.s32.totalorder 1, %s14
      %p171 = scmp.lt.s32.totalorder %s14, 3
      %p172 = pnand %p170, %p171
      %p173 = pneg %p172
      // Predicated region
      $region29: #{tpu_custom_call.1} parent=5 // pred_check
        _
      $region30: #{tpu_custom_call.1} parent=5 // pred_check_branch
        %175 = sbr.rel (%p172) target = $region32
      $region31: #{tpu_custom_call.1} parent=5 // pred_region
        %s176 = ssub.s32 %s14, 1
        // Predicated region
        $region33: #{tpu_custom_call.1} parent=31 // pred_check
          %p177 = pneg %p35
        $region34: #{tpu_custom_call.1} parent=31 // pred_check_branch
          %179 = sbr.rel (%p177) target = $region36
        $region35: #{tpu_custom_call.1} parent=31 // pred_region
          %180 = dma.done [#allocation3], 64512
        $region36: #{tpu_custom_call.1} parent=31 // pred_fallthru
          _
        // Predicated region
        $region37: #{tpu_custom_call.1} parent=31 // pred_check
          %p181 = pneg %p56
        $region38: #{tpu_custom_call.1} parent=31 // pred_check_branch
          %183 = sbr.rel (%p181) target = $region40
        $region39: #{tpu_custom_call.1} parent=31 // pred_region
          %184 = dma.done [#allocation6], 96
        $region40: #{tpu_custom_call.1} parent=31 // pred_fallthru
          _
        %s185 = sand.u32 %s19, 1
        %s186 = scalar_lea.sflag [#allocation3], %s185
        %s187 = sand.u32 %s69, 1
        %s188 = smul.addr %s187, 48
        %s189 = scalar_lea.vmem [#allocation7], %s188
        // Predicated region
        $region41: #{tpu_custom_call.1} parent=31 // pred_check
          %p190 = pneg %p82
        $region42: #{tpu_custom_call.1} parent=31 // pred_check_branch
          %192 = sbr.rel (%p190) target = $region44
        $region43: #{tpu_custom_call.1} parent=31 // pred_region
          %193 = dma.done %s186, 768
        $region44: #{tpu_custom_call.1} parent=31 // pred_fallthru
          _
        %p194 = pneg %p35
        %p195 = pneg %p32
        %p196 = pneg %p56
        %p197 = pneg %p53
        %s198 = sand.u32 %s19, 1
        %s199 = scalar_lea.sflag [#allocation3], %s198
        %s200 = sand.u32 %s69, 1
        %s201 = smul.addr %s200, 48
        %s202 = scalar_lea.vmem [#allocation7], %s201
        %p203 = pneg %p82
        %p204 = pneg %p79
        %p205 = pneg %p108
        %p206 = pneg %p105
        %s207 = sand.u32 %s95, 1
        %s208 = scalar_lea.sflag [#allocation4], %s207
        %s209 = sand.u32 %s95, 1
        %s210 = smul.addr %s209, 48
        %s211 = scalar_lea.vmem [#allocation8], %s210
        %v212 = vld [vmem:[%s189] sm:$0xff]
        %v213 = vld [vmem:[%s189 + $0x8] sm:$0xff]
        %v214 = vld [vmem:[%s189 + $0x10] sm:$0xff]
        %v215 = vld [vmem:[%s189 + $0x18] sm:$0xff]
        %v216 = vld [vmem:[%s189 + $0x20] sm:$0xff]
        %v217 = vld [vmem:[%s189 + $0x28] sm:$0xff]
        %v218 = vld [vmem:[#allocation2] sm:$0xff]
        %v219 = vld [vmem:[#allocation2 + $0x8] sm:$0xff]
        %v220 = vld [vmem:[#allocation2 + $0x10] sm:$0xff]
        %v221 = vld [vmem:[#allocation2 + $0x18] sm:$0xff]
        %v222 = vld [vmem:[#allocation2 + $0x20] sm:$0xff]
        %v223 = vld [vmem:[#allocation2 + $0x28] sm:$0xff]
        %v224 = vld [vmem:[#allocation2 + $0x30] sm:$0xff]
        %v225 = vld [vmem:[#allocation2 + $0x38] sm:$0xff]
        %v226 = vld [vmem:[#allocation2 + $0x40] sm:$0xff]
        %v227 = vld [vmem:[#allocation2 + $0x48] sm:$0xff]
        %v228 = vld [vmem:[#allocation2 + $0x50] sm:$0xff]
        %v229 = vld [vmem:[#allocation2 + $0x58] sm:$0xff]
        %v230 = vld [vmem:[#allocation2 + $0x60] sm:$0xff]
        %v231 = vld [vmem:[#allocation2 + $0x68] sm:$0xff]
        %v232 = vld [vmem:[#allocation2 + $0x70] sm:$0xff]
        %v233 = vld [vmem:[#allocation2 + $0x78] sm:$0xff]
        %v234 = vld [vmem:[#allocation2 + $0x80] sm:$0xff]
        %v235 = vld [vmem:[#allocation2 + $0x88] sm:$0xff]
        %v236 = vld [vmem:[#allocation2 + $0x90] sm:$0xff]
        %v237 = vld [vmem:[#allocation2 + $0x98] sm:$0xff]
        %v238 = vld [vmem:[#allocation2 + $0xa0] sm:$0xff]
        %v239 = vld [vmem:[#allocation2 + $0xa8] sm:$0xff]
        %v240 = vld [vmem:[#allocation2 + $0xb0] sm:$0xff]
        %v241 = vld [vmem:[#allocation2 + $0xb8] sm:$0xff]
        %v242 = vld [vmem:[#allocation2 + $0xc0] sm:$0xff]
        %v243 = vld [vmem:[#allocation2 + $0xc8] sm:$0xff]
        %v244 = vld [vmem:[#allocation2 + $0xd0] sm:$0xff]
        %v245 = vld [vmem:[#allocation2 + $0xd8] sm:$0xff]
        %v246 = vld [vmem:[#allocation2 + $0xe0] sm:$0xff]
        %v247 = vld [vmem:[#allocation2 + $0xe8] sm:$0xff]
        %v248 = vld [vmem:[#allocation2 + $0xf0] sm:$0xff]
        %v249 = vld [vmem:[#allocation2 + $0xf8] sm:$0xff]
        %v250 = vld [vmem:[#allocation2 + $0x100] sm:$0xff]
        %v251 = vld [vmem:[#allocation2 + $0x108] sm:$0xff]
        %v252 = vld [vmem:[#allocation2 + $0x110] sm:$0xff]
        %v253 = vld [vmem:[#allocation2 + $0x118] sm:$0xff]
        %v254 = vld [vmem:[#allocation2 + $0x120] sm:$0xff]
        %v255 = vld [vmem:[#allocation2 + $0x128] sm:$0xff]
        %v256 = vld [vmem:[#allocation2 + $0x130] sm:$0xff]
        %v257 = vld [vmem:[#allocation2 + $0x138] sm:$0xff]
        %v258 = vld [vmem:[#allocation2 + $0x140] sm:$0xff]
        %v259 = vld [vmem:[#allocation2 + $0x148] sm:$0xff]
        %v260 = vld [vmem:[#allocation2 + $0x150] sm:$0xff]
        %v261 = vld [vmem:[#allocation2 + $0x158] sm:$0xff]
        %v262 = vld [vmem:[#allocation2 + $0x160] sm:$0xff]
        %v263 = vld [vmem:[#allocation2 + $0x168] sm:$0xff]
        %v264 = vld [vmem:[#allocation2 + $0x170] sm:$0xff]
        %v265 = vld [vmem:[#allocation2 + $0x178] sm:$0xff]
        %v266 = vld [vmem:[#allocation2 + $0x180] sm:$0xff]
        %v267 = vld [vmem:[#allocation2 + $0x188] sm:$0xff]
        %v268 = vld [vmem:[#allocation2 + $0x190] sm:$0xff]
        %v269 = vld [vmem:[#allocation2 + $0x198] sm:$0xff]
        %v270 = vld [vmem:[#allocation2 + $0x1a0] sm:$0xff]
        %v271 = vld [vmem:[#allocation2 + $0x1a8] sm:$0xff]
        %v272 = vld [vmem:[#allocation2 + $0x1b0] sm:$0xff]
        %v273 = vld [vmem:[#allocation2 + $0x1b8] sm:$0xff]
        %v274 = vld [vmem:[#allocation2 + $0x1c0] sm:$0xff]
        %v275 = vld [vmem:[#allocation2 + $0x1c8] sm:$0xff]
        %v276 = vld [vmem:[#allocation2 + $0x1d0] sm:$0xff]
        %v277 = vld [vmem:[#allocation2 + $0x1d8] sm:$0xff]
        %v278 = vld [vmem:[#allocation2 + $0x1e0] sm:$0xff]
        %v279 = vld [vmem:[#allocation2 + $0x1e8] sm:$0xff]
        %v280 = vld [vmem:[#allocation2 + $0x1f0] sm:$0xff]
        %v281 = vld [vmem:[#allocation2 + $0x1f8] sm:$0xff]
        %v282 = vld [vmem:[#allocation2 + $0x200] sm:$0xff]
        %v283 = vld [vmem:[#allocation2 + $0x208] sm:$0xff]
        %v284 = vld [vmem:[#allocation2 + $0x210] sm:$0xff]
        %v285 = vld [vmem:[#allocation2 + $0x218] sm:$0xff]
        %v286 = vld [vmem:[#allocation2 + $0x220] sm:$0xff]
        %v287 = vld [vmem:[#allocation2 + $0x228] sm:$0xff]
        %v288 = vld [vmem:[#allocation2 + $0x230] sm:$0xff]
        %v289 = vld [vmem:[#allocation2 + $0x238] sm:$0xff]
        %v290 = vld [vmem:[#allocation2 + $0x240] sm:$0xff]
        %v291 = vld [vmem:[#allocation2 + $0x248] sm:$0xff]
        %v292 = vld [vmem:[#allocation2 + $0x250] sm:$0xff]
        %v293 = vld [vmem:[#allocation2 + $0x258] sm:$0xff]
        %v294 = vld [vmem:[#allocation2 + $0x260] sm:$0xff]
        %v295 = vld [vmem:[#allocation2 + $0x268] sm:$0xff]
        %v296 = vld [vmem:[#allocation2 + $0x270] sm:$0xff]
        %v297 = vld [vmem:[#allocation2 + $0x278] sm:$0xff]
        %v298 = vld [vmem:[#allocation2 + $0x280] sm:$0xff]
        %v299 = vld [vmem:[#allocation2 + $0x288] sm:$0xff]
        %v300 = vld [vmem:[#allocation2 + $0x290] sm:$0xff]
        %v301 = vld [vmem:[#allocation2 + $0x298] sm:$0xff]
        %v302 = vld [vmem:[#allocation2 + $0x2a0] sm:$0xff]
        %v303 = vld [vmem:[#allocation2 + $0x2a8] sm:$0xff]
        %v304 = vld [vmem:[#allocation2 + $0x2b0] sm:$0xff]
        %v305 = vld [vmem:[#allocation2 + $0x2b8] sm:$0xff]
        %v306 = vld [vmem:[#allocation2 + $0x2c0] sm:$0xff]
        %v307 = vld [vmem:[#allocation2 + $0x2c8] sm:$0xff]
        %v308 = vld [vmem:[#allocation2 + $0x2d0] sm:$0xff]
        %v309 = vld [vmem:[#allocation2 + $0x2d8] sm:$0xff]
        %v310 = vld [vmem:[#allocation2 + $0x2e0] sm:$0xff]
        %v311 = vld [vmem:[#allocation2 + $0x2e8] sm:$0xff]
        %v312 = vld [vmem:[#allocation2 + $0x2f0] sm:$0xff]
        %v313 = vld [vmem:[#allocation2 + $0x2f8] sm:$0xff]
        %v314 = vld [vmem:[#allocation2 + $0x300] sm:$0xff]
        %v315 = vld [vmem:[#allocation2 + $0x308] sm:$0xff]
        %v316 = vld [vmem:[#allocation2 + $0x310] sm:$0xff]
        %v317 = vld [vmem:[#allocation2 + $0x318] sm:$0xff]
        %v318 = vld [vmem:[#allocation2 + $0x320] sm:$0xff]
        %v319 = vld [vmem:[#allocation2 + $0x328] sm:$0xff]
        %v320 = vld [vmem:[#allocation2 + $0x330] sm:$0xff]
        %v321 = vld [vmem:[#allocation2 + $0x338] sm:$0xff]
        %v322 = vld [vmem:[#allocation2 + $0x340] sm:$0xff]
        %v323 = vld [vmem:[#allocation2 + $0x348] sm:$0xff]
        %v324 = vld [vmem:[#allocation2 + $0x350] sm:$0xff]
        %v325 = vld [vmem:[#allocation2 + $0x358] sm:$0xff]
        %v326 = vld [vmem:[#allocation2 + $0x360] sm:$0xff]
        %v327 = vld [vmem:[#allocation2 + $0x368] sm:$0xff]
        %v328 = vld [vmem:[#allocation2 + $0x370] sm:$0xff]
        %v329 = vld [vmem:[#allocation2 + $0x378] sm:$0xff]
        %v330 = vld [vmem:[#allocation2 + $0x380] sm:$0xff]
        %v331 = vld [vmem:[#allocation2 + $0x388] sm:$0xff]
        %v332 = vld [vmem:[#allocation2 + $0x390] sm:$0xff]
        %v333 = vld [vmem:[#allocation2 + $0x398] sm:$0xff]
        %v334 = vld [vmem:[#allocation2 + $0x3a0] sm:$0xff]
        %v335 = vld [vmem:[#allocation2 + $0x3a8] sm:$0xff]
        %v336 = vld [vmem:[#allocation2 + $0x3b0] sm:$0xff]
        %v337 = vld [vmem:[#allocation2 + $0x3b8] sm:$0xff]
        %v338 = vld [vmem:[#allocation2 + $0x3c0] sm:$0xff]
        %v339 = vld [vmem:[#allocation2 + $0x3c8] sm:$0xff]
        %v340 = vld [vmem:[#allocation2 + $0x3d0] sm:$0xff]
        %v341 = vld [vmem:[#allocation2 + $0x3d8] sm:$0xff]
        %v342 = vld [vmem:[#allocation2 + $0x3e0] sm:$0xff]
        %v343 = vld [vmem:[#allocation2 + $0x3e8] sm:$0xff]
        %v344 = vld [vmem:[#allocation2 + $0x3f0] sm:$0xff]
        %v345 = vld [vmem:[#allocation2 + $0x3f8] sm:$0xff]
        %v346 = vld [vmem:[#allocation2 + $0x400] sm:$0xff]
        %v347 = vld [vmem:[#allocation2 + $0x408] sm:$0xff]
        %v348 = vld [vmem:[#allocation2 + $0x410] sm:$0xff]
        %v349 = vld [vmem:[#allocation2 + $0x418] sm:$0xff]
        %v350 = vld [vmem:[#allocation2 + $0x420] sm:$0xff]
        %v351 = vld [vmem:[#allocation2 + $0x428] sm:$0xff]
        %v352 = vld [vmem:[#allocation2 + $0x430] sm:$0xff]
        %v353 = vld [vmem:[#allocation2 + $0x438] sm:$0xff]
        %v354 = vld [vmem:[#allocation2 + $0x440] sm:$0xff]
        %v355 = vld [vmem:[#allocation2 + $0x448] sm:$0xff]
        %v356 = vld [vmem:[#allocation2 + $0x450] sm:$0xff]
        %v357 = vld [vmem:[#allocation2 + $0x458] sm:$0xff]
        %v358 = vld [vmem:[#allocation2 + $0x460] sm:$0xff]
        %v359 = vld [vmem:[#allocation2 + $0x468] sm:$0xff]
        %v360 = vld [vmem:[#allocation2 + $0x470] sm:$0xff]
        %v361 = vld [vmem:[#allocation2 + $0x478] sm:$0xff]
        %v362 = vld [vmem:[#allocation2 + $0x480] sm:$0xff]
        %v363 = vld [vmem:[#allocation2 + $0x488] sm:$0xff]
        %v364 = vld [vmem:[#allocation2 + $0x490] sm:$0xff]
        %v365 = vld [vmem:[#allocation2 + $0x498] sm:$0xff]
        %v366 = vld [vmem:[#allocation2 + $0x4a0] sm:$0xff]
        %v367 = vld [vmem:[#allocation2 + $0x4a8] sm:$0xff]
        %v368 = vld [vmem:[#allocation2 + $0x4b0] sm:$0xff]
        %v369 = vld [vmem:[#allocation2 + $0x4b8] sm:$0xff]
        %v370 = vld [vmem:[#allocation2 + $0x4c0] sm:$0xff]
        %v371 = vld [vmem:[#allocation2 + $0x4c8] sm:$0xff]
        %v372 = vld [vmem:[#allocation2 + $0x4d0] sm:$0xff]
        %v373 = vld [vmem:[#allocation2 + $0x4d8] sm:$0xff]
        %v374 = vld [vmem:[#allocation2 + $0x4e0] sm:$0xff]
        %v375 = vld [vmem:[#allocation2 + $0x4e8] sm:$0xff]
        %v376 = vld [vmem:[#allocation2 + $0x4f0] sm:$0xff]
        %v377 = vld [vmem:[#allocation2 + $0x4f8] sm:$0xff]
        %v378 = vld [vmem:[#allocation2 + $0x500] sm:$0xff]
        %v379 = vld [vmem:[#allocation2 + $0x508] sm:$0xff]
        %v380 = vld [vmem:[#allocation2 + $0x510] sm:$0xff]
        %v381 = vld [vmem:[#allocation2 + $0x518] sm:$0xff]
        %v382 = vld [vmem:[#allocation2 + $0x520] sm:$0xff]
        %v383 = vld [vmem:[#allocation2 + $0x528] sm:$0xff]
        %v384 = vld [vmem:[#allocation2 + $0x530] sm:$0xff]
        %v385 = vld [vmem:[#allocation2 + $0x538] sm:$0xff]
        %v386 = vld [vmem:[#allocation2 + $0x540] sm:$0xff]
        %v387 = vld [vmem:[#allocation2 + $0x548] sm:$0xff]
        %v388 = vld [vmem:[#allocation2 + $0x550] sm:$0xff]
        %v389 = vld [vmem:[#allocation2 + $0x558] sm:$0xff]
        %v390 = vld [vmem:[#allocation2 + $0x560] sm:$0xff]
        %v391 = vld [vmem:[#allocation2 + $0x568] sm:$0xff]
        %v392 = vld [vmem:[#allocation2 + $0x570] sm:$0xff]
        %v393 = vld [vmem:[#allocation2 + $0x578] sm:$0xff]
        %v394 = vld [vmem:[#allocation2 + $0x580] sm:$0xff]
        %v395 = vld [vmem:[#allocation2 + $0x588] sm:$0xff]
        %v396 = vld [vmem:[#allocation2 + $0x590] sm:$0xff]
        %v397 = vld [vmem:[#allocation2 + $0x598] sm:$0xff]
        %v398 = vld [vmem:[#allocation2 + $0x5a0] sm:$0xff]
        %v399 = vld [vmem:[#allocation2 + $0x5a8] sm:$0xff]
        %v400 = vld [vmem:[#allocation2 + $0x5b0] sm:$0xff]
        %v401 = vld [vmem:[#allocation2 + $0x5b8] sm:$0xff]
        %v402 = vld [vmem:[#allocation2 + $0x5c0] sm:$0xff]
        %v403 = vld [vmem:[#allocation2 + $0x5c8] sm:$0xff]
        %v404 = vld [vmem:[#allocation2 + $0x5d0] sm:$0xff]
        %v405 = vld [vmem:[#allocation2 + $0x5d8] sm:$0xff]
        %v406 = vld [vmem:[#allocation2 + $0x5e0] sm:$0xff]
        %v407 = vld [vmem:[#allocation2 + $0x5e8] sm:$0xff]
        %v408 = vld [vmem:[#allocation2 + $0x5f0] sm:$0xff]
        %v409 = vld [vmem:[#allocation2 + $0x5f8] sm:$0xff]
        %v410 = vld [vmem:[#allocation2 + $0x600] sm:$0xff]
        %v411 = vld [vmem:[#allocation2 + $0x608] sm:$0xff]
        %v412 = vld [vmem:[#allocation2 + $0x610] sm:$0xff]
        %v413 = vld [vmem:[#allocation2 + $0x618] sm:$0xff]
        %v414 = vld [vmem:[#allocation2 + $0x620] sm:$0xff]
        %v415 = vld [vmem:[#allocation2 + $0x628] sm:$0xff]
        %v416 = vld [vmem:[#allocation2 + $0x630] sm:$0xff]
        %v417 = vld [vmem:[#allocation2 + $0x638] sm:$0xff]
        %v418 = vld [vmem:[#allocation2 + $0x640] sm:$0xff]
        %v419 = vld [vmem:[#allocation2 + $0x648] sm:$0xff]
        %v420 = vld [vmem:[#allocation2 + $0x650] sm:$0xff]
        %v421 = vld [vmem:[#allocation2 + $0x658] sm:$0xff]
        %v422 = vld [vmem:[#allocation2 + $0x660] sm:$0xff]
        %v423 = vld [vmem:[#allocation2 + $0x668] sm:$0xff]
        %v424 = vld [vmem:[#allocation2 + $0x670] sm:$0xff]
        %v425 = vld [vmem:[#allocation2 + $0x678] sm:$0xff]
        %v426 = vld [vmem:[#allocation2 + $0x680] sm:$0xff]
        %v427 = vld [vmem:[#allocation2 + $0x688] sm:$0xff]
        %v428 = vld [vmem:[#allocation2 + $0x690] sm:$0xff]
        %v429 = vld [vmem:[#allocation2 + $0x698] sm:$0xff]
        %v430 = vld [vmem:[#allocation2 + $0x6a0] sm:$0xff]
        %v431 = vld [vmem:[#allocation2 + $0x6a8] sm:$0xff]
        %v432 = vld [vmem:[#allocation2 + $0x6b0] sm:$0xff]
        %v433 = vld [vmem:[#allocation2 + $0x6b8] sm:$0xff]
        %v434 = vld [vmem:[#allocation2 + $0x6c0] sm:$0xff]
        %v435 = vld [vmem:[#allocation2 + $0x6c8] sm:$0xff]
        %v436 = vld [vmem:[#allocation2 + $0x6d0] sm:$0xff]
        %v437 = vld [vmem:[#allocation2 + $0x6d8] sm:$0xff]
        %v438 = vld [vmem:[#allocation2 + $0x6e0] sm:$0xff]
        %v439 = vld [vmem:[#allocation2 + $0x6e8] sm:$0xff]
        %v440 = vld [vmem:[#allocation2 + $0x6f0] sm:$0xff]
        %v441 = vld [vmem:[#allocation2 + $0x6f8] sm:$0xff]
        %v442 = vld [vmem:[#allocation2 + $0x700] sm:$0xff]
        %v443 = vld [vmem:[#allocation2 + $0x708] sm:$0xff]
        %v444 = vld [vmem:[#allocation2 + $0x710] sm:$0xff]
        %v445 = vld [vmem:[#allocation2 + $0x718] sm:$0xff]
        %v446 = vld [vmem:[#allocation2 + $0x720] sm:$0xff]
        %v447 = vld [vmem:[#allocation2 + $0x728] sm:$0xff]
        %v448 = vld [vmem:[#allocation2 + $0x730] sm:$0xff]
        %v449 = vld [vmem:[#allocation2 + $0x738] sm:$0xff]
        %v450 = vld [vmem:[#allocation2 + $0x740] sm:$0xff]
        %v451 = vld [vmem:[#allocation2 + $0x748] sm:$0xff]
        %v452 = vld [vmem:[#allocation2 + $0x750] sm:$0xff]
        %v453 = vld [vmem:[#allocation2 + $0x758] sm:$0xff]
        %v454 = vld [vmem:[#allocation2 + $0x760] sm:$0xff]
        %v455 = vld [vmem:[#allocation2 + $0x768] sm:$0xff]
        %v456 = vld [vmem:[#allocation2 + $0x770] sm:$0xff]
        %v457 = vld [vmem:[#allocation2 + $0x778] sm:$0xff]
        %v458 = vld [vmem:[#allocation2 + $0x780] sm:$0xff]
        %v459 = vld [vmem:[#allocation2 + $0x788] sm:$0xff]
        %v460 = vld [vmem:[#allocation2 + $0x790] sm:$0xff]
        %v461 = vld [vmem:[#allocation2 + $0x798] sm:$0xff]
        %v462 = vld [vmem:[#allocation2 + $0x7a0] sm:$0xff]
        %v463 = vld [vmem:[#allocation2 + $0x7a8] sm:$0xff]
        %v464 = vld [vmem:[#allocation2 + $0x7b0] sm:$0xff]
        %v465 = vld [vmem:[#allocation2 + $0x7b8] sm:$0xff]
        %v466 = vld [vmem:[#allocation2 + $0x7c0] sm:$0xff]
        %v467 = vld [vmem:[#allocation2 + $0x7c8] sm:$0xff]
        %v468 = vld [vmem:[#allocation2 + $0x7d0] sm:$0xff]
        %v469 = vld [vmem:[#allocation2 + $0x7d8] sm:$0xff]
        %v470 = vld [vmem:[#allocation2 + $0x7e0] sm:$0xff]
        %v471 = vld [vmem:[#allocation2 + $0x7e8] sm:$0xff]
        %v472 = vld [vmem:[#allocation2 + $0x7f0] sm:$0xff]
        %v473 = vld [vmem:[#allocation2 + $0x7f8] sm:$0xff]
        %v474 = vld [vmem:[#allocation2 + $0x800] sm:$0xff]
        %v475 = vld [vmem:[#allocation2 + $0x808] sm:$0xff]
        %v476 = vld [vmem:[#allocation2 + $0x810] sm:$0xff]
        %v477 = vld [vmem:[#allocation2 + $0x818] sm:$0xff]
        %v478 = vld [vmem:[#allocation2 + $0x820] sm:$0xff]
        %v479 = vld [vmem:[#allocation2 + $0x828] sm:$0xff]
        %v480 = vld [vmem:[#allocation2 + $0x830] sm:$0xff]
        %v481 = vld [vmem:[#allocation2 + $0x838] sm:$0xff]
        %v482 = vld [vmem:[#allocation2 + $0x840] sm:$0xff]
        %v483 = vld [vmem:[#allocation2 + $0x848] sm:$0xff]
        %v484 = vld [vmem:[#allocation2 + $0x850] sm:$0xff]
        %v485 = vld [vmem:[#allocation2 + $0x858] sm:$0xff]
        %v486 = vld [vmem:[#allocation2 + $0x860] sm:$0xff]
        %v487 = vld [vmem:[#allocation2 + $0x868] sm:$0xff]
        %v488 = vld [vmem:[#allocation2 + $0x870] sm:$0xff]
        %v489 = vld [vmem:[#allocation2 + $0x878] sm:$0xff]
        %v490 = vld [vmem:[#allocation2 + $0x880] sm:$0xff]
        %v491 = vld [vmem:[#allocation2 + $0x888] sm:$0xff]
        %v492 = vld [vmem:[#allocation2 + $0x890] sm:$0xff]
        %v493 = vld [vmem:[#allocation2 + $0x898] sm:$0xff]
        %v494 = vld [vmem:[#allocation2 + $0x8a0] sm:$0xff]
        %v495 = vld [vmem:[#allocation2 + $0x8a8] sm:$0xff]
        %v496 = vld [vmem:[#allocation2 + $0x8b0] sm:$0xff]
        %v497 = vld [vmem:[#allocation2 + $0x8b8] sm:$0xff]
        %v498 = vld [vmem:[#allocation2 + $0x8c0] sm:$0xff]
        %v499 = vld [vmem:[#allocation2 + $0x8c8] sm:$0xff]
        %v500 = vld [vmem:[#allocation2 + $0x8d0] sm:$0xff]
        %v501 = vld [vmem:[#allocation2 + $0x8d8] sm:$0xff]
        %v502 = vld [vmem:[#allocation2 + $0x8e0] sm:$0xff]
        %v503 = vld [vmem:[#allocation2 + $0x8e8] sm:$0xff]
        %v504 = vld [vmem:[#allocation2 + $0x8f0] sm:$0xff]
        %v505 = vld [vmem:[#allocation2 + $0x8f8] sm:$0xff]
        %v506 = vld [vmem:[#allocation2 + $0x900] sm:$0xff]
        %v507 = vld [vmem:[#allocation2 + $0x908] sm:$0xff]
        %v508 = vld [vmem:[#allocation2 + $0x910] sm:$0xff]
        %v509 = vld [vmem:[#allocation2 + $0x918] sm:$0xff]
        %v510 = vld [vmem:[#allocation2 + $0x920] sm:$0xff]
        %v511 = vld [vmem:[#allocation2 + $0x928] sm:$0xff]
        %v512 = vld [vmem:[#allocation2 + $0x930] sm:$0xff]
        %v513 = vld [vmem:[#allocation2 + $0x938] sm:$0xff]
        %v514 = vld [vmem:[#allocation2 + $0x940] sm:$0xff]
        %v515 = vld [vmem:[#allocation2 + $0x948] sm:$0xff]
        %v516 = vld [vmem:[#allocation2 + $0x950] sm:$0xff]
        %v517 = vld [vmem:[#allocation2 + $0x958] sm:$0xff]
        %v518 = vld [vmem:[#allocation2 + $0x960] sm:$0xff]
        %v519 = vld [vmem:[#allocation2 + $0x968] sm:$0xff]
        %v520 = vld [vmem:[#allocation2 + $0x970] sm:$0xff]
        %v521 = vld [vmem:[#allocation2 + $0x978] sm:$0xff]
        %v522 = vld [vmem:[#allocation2 + $0x980] sm:$0xff]
        %v523 = vld [vmem:[#allocation2 + $0x988] sm:$0xff]
        %v524 = vld [vmem:[#allocation2 + $0x990] sm:$0xff]
        %v525 = vld [vmem:[#allocation2 + $0x998] sm:$0xff]
        %v526 = vld [vmem:[#allocation2 + $0x9a0] sm:$0xff]
        %v527 = vld [vmem:[#allocation2 + $0x9a8] sm:$0xff]
        %v528 = vld [vmem:[#allocation2 + $0x9b0] sm:$0xff]
        %v529 = vld [vmem:[#allocation2 + $0x9b8] sm:$0xff]
        %v530 = vld [vmem:[#allocation2 + $0x9c0] sm:$0xff]
        %v531 = vld [vmem:[#allocation2 + $0x9c8] sm:$0xff]
        %v532 = vld [vmem:[#allocation2 + $0x9d0] sm:$0xff]
        %v533 = vld [vmem:[#allocation2 + $0x9d8] sm:$0xff]
        %v534 = vld [vmem:[#allocation2 + $0x9e0] sm:$0xff]
        %v535 = vld [vmem:[#allocation2 + $0x9e8] sm:$0xff]
        %v536 = vld [vmem:[#allocation2 + $0x9f0] sm:$0xff]
        %v537 = vld [vmem:[#allocation2 + $0x9f8] sm:$0xff]
        %v538 = vld [vmem:[#allocation2 + $0xa00] sm:$0xff]
        %v539 = vld [vmem:[#allocation2 + $0xa08] sm:$0xff]
        %v540 = vld [vmem:[#allocation2 + $0xa10] sm:$0xff]
        %v541 = vld [vmem:[#allocation2 + $0xa18] sm:$0xff]
        %v542 = vld [vmem:[#allocation2 + $0xa20] sm:$0xff]
        %v543 = vld [vmem:[#allocation2 + $0xa28] sm:$0xff]
        %v544 = vld [vmem:[#allocation2 + $0xa30] sm:$0xff]
        %v545 = vld [vmem:[#allocation2 + $0xa38] sm:$0xff]
        %v546 = vld [vmem:[#allocation2 + $0xa40] sm:$0xff]
        %v547 = vld [vmem:[#allocation2 + $0xa48] sm:$0xff]
        %v548 = vld [vmem:[#allocation2 + $0xa50] sm:$0xff]
        %v549 = vld [vmem:[#allocation2 + $0xa58] sm:$0xff]
        %v550 = vld [vmem:[#allocation2 + $0xa60] sm:$0xff]
        %v551 = vld [vmem:[#allocation2 + $0xa68] sm:$0xff]
        %v552 = vld [vmem:[#allocation2 + $0xa70] sm:$0xff]
        %v553 = vld [vmem:[#allocation2 + $0xa78] sm:$0xff]
        %v554 = vld [vmem:[#allocation2 + $0xa80] sm:$0xff]
        %v555 = vld [vmem:[#allocation2 + $0xa88] sm:$0xff]
        %v556 = vld [vmem:[#allocation2 + $0xa90] sm:$0xff]
        %v557 = vld [vmem:[#allocation2 + $0xa98] sm:$0xff]
        %v558 = vld [vmem:[#allocation2 + $0xaa0] sm:$0xff]
        %v559 = vld [vmem:[#allocation2 + $0xaa8] sm:$0xff]
        %v560 = vld [vmem:[#allocation2 + $0xab0] sm:$0xff]
        %v561 = vld [vmem:[#allocation2 + $0xab8] sm:$0xff]
        %v562 = vld [vmem:[#allocation2 + $0xac0] sm:$0xff]
        %v563 = vld [vmem:[#allocation2 + $0xac8] sm:$0xff]
        %v564 = vld [vmem:[#allocation2 + $0xad0] sm:$0xff]
        %v565 = vld [vmem:[#allocation2 + $0xad8] sm:$0xff]
        %v566 = vld [vmem:[#allocation2 + $0xae0] sm:$0xff]
        %v567 = vld [vmem:[#allocation2 + $0xae8] sm:$0xff]
        %v568 = vld [vmem:[#allocation2 + $0xaf0] sm:$0xff]
        %v569 = vld [vmem:[#allocation2 + $0xaf8] sm:$0xff]
        %v570 = vld [vmem:[#allocation2 + $0xb00] sm:$0xff]
        %v571 = vld [vmem:[#allocation2 + $0xb08] sm:$0xff]
        %v572 = vld [vmem:[#allocation2 + $0xb10] sm:$0xff]
        %v573 = vld [vmem:[#allocation2 + $0xb18] sm:$0xff]
        %v574 = vld [vmem:[#allocation2 + $0xb20] sm:$0xff]
        %v575 = vld [vmem:[#allocation2 + $0xb28] sm:$0xff]
        %v576 = vld [vmem:[#allocation2 + $0xb30] sm:$0xff]
        %v577 = vld [vmem:[#allocation2 + $0xb38] sm:$0xff]
        %v578 = vld [vmem:[#allocation2 + $0xb40] sm:$0xff]
        %v579 = vld [vmem:[#allocation2 + $0xb48] sm:$0xff]
        %v580 = vld [vmem:[#allocation2 + $0xb50] sm:$0xff]
        %v581 = vld [vmem:[#allocation2 + $0xb58] sm:$0xff]
        %v582 = vld [vmem:[#allocation2 + $0xb60] sm:$0xff]
        %v583 = vld [vmem:[#allocation2 + $0xb68] sm:$0xff]
        %v584 = vld [vmem:[#allocation2 + $0xb70] sm:$0xff]
        %v585 = vld [vmem:[#allocation2 + $0xb78] sm:$0xff]
        %v586 = vld [vmem:[#allocation2 + $0xb80] sm:$0xff]
        %v587 = vld [vmem:[#allocation2 + $0xb88] sm:$0xff]
        %v588 = vld [vmem:[#allocation2 + $0xb90] sm:$0xff]
        %v589 = vld [vmem:[#allocation2 + $0xb98] sm:$0xff]
        %v590 = vld [vmem:[#allocation2 + $0xba0] sm:$0xff]
        %v591 = vld [vmem:[#allocation2 + $0xba8] sm:$0xff]
        %v592 = vld [vmem:[#allocation2 + $0xbb0] sm:$0xff]
        %v593 = vld [vmem:[#allocation2 + $0xbb8] sm:$0xff]
        %v594 = vld [vmem:[#allocation2 + $0xbc0] sm:$0xff]
        %v595 = vld [vmem:[#allocation2 + $0xbc8] sm:$0xff]
        %v596 = vld [vmem:[#allocation2 + $0xbd0] sm:$0xff]
        %v597 = vld [vmem:[#allocation2 + $0xbd8] sm:$0xff]
        %v598 = vld [vmem:[#allocation2 + $0xbe0] sm:$0xff]
        %v599 = vld [vmem:[#allocation2 + $0xbe8] sm:$0xff]
        %v600 = vld [vmem:[#allocation2 + $0xbf0] sm:$0xff]
        %v601 = vld [vmem:[#allocation2 + $0xbf8] sm:$0xff]
        %v602 = vld [vmem:[#allocation2 + $0xc00] sm:$0xff]
        %v603 = vld [vmem:[#allocation2 + $0xc08] sm:$0xff]
        %v604 = vld [vmem:[#allocation2 + $0xc10] sm:$0xff]
        %v605 = vld [vmem:[#allocation2 + $0xc18] sm:$0xff]
        %v606 = vld [vmem:[#allocation2 + $0xc20] sm:$0xff]
        %v607 = vld [vmem:[#allocation2 + $0xc28] sm:$0xff]
        %v608 = vld [vmem:[#allocation2 + $0xc30] sm:$0xff]
        %v609 = vld [vmem:[#allocation2 + $0xc38] sm:$0xff]
        %v610 = vld [vmem:[#allocation2 + $0xc40] sm:$0xff]
        %v611 = vld [vmem:[#allocation2 + $0xc48] sm:$0xff]
        %v612 = vld [vmem:[#allocation2 + $0xc50] sm:$0xff]
        %v613 = vld [vmem:[#allocation2 + $0xc58] sm:$0xff]
        %v614 = vld [vmem:[#allocation2 + $0xc60] sm:$0xff]
        %v615 = vld [vmem:[#allocation2 + $0xc68] sm:$0xff]
        %v616 = vld [vmem:[#allocation2 + $0xc70] sm:$0xff]
        %v617 = vld [vmem:[#allocation2 + $0xc78] sm:$0xff]
        %v618 = vld [vmem:[#allocation2 + $0xc80] sm:$0xff]
        %v619 = vld [vmem:[#allocation2 + $0xc88] sm:$0xff]
        %v620 = vld [vmem:[#allocation2 + $0xc90] sm:$0xff]
        %v621 = vld [vmem:[#allocation2 + $0xc98] sm:$0xff]
        %v622 = vld [vmem:[#allocation2 + $0xca0] sm:$0xff]
        %v623 = vld [vmem:[#allocation2 + $0xca8] sm:$0xff]
        %v624 = vld [vmem:[#allocation2 + $0xcb0] sm:$0xff]
        %v625 = vld [vmem:[#allocation2 + $0xcb8] sm:$0xff]
        %v626 = vld [vmem:[#allocation2 + $0xcc0] sm:$0xff]
        %v627 = vld [vmem:[#allocation2 + $0xcc8] sm:$0xff]
        %v628 = vld [vmem:[#allocation2 + $0xcd0] sm:$0xff]
        %v629 = vld [vmem:[#allocation2 + $0xcd8] sm:$0xff]
        %v630 = vld [vmem:[#allocation2 + $0xce0] sm:$0xff]
        %v631 = vld [vmem:[#allocation2 + $0xce8] sm:$0xff]
        %v632 = vld [vmem:[#allocation2 + $0xcf0] sm:$0xff]
        %v633 = vld [vmem:[#allocation2 + $0xcf8] sm:$0xff]
        %v634 = vld [vmem:[#allocation2 + $0xd00] sm:$0xff]
        %v635 = vld [vmem:[#allocation2 + $0xd08] sm:$0xff]
        %v636 = vld [vmem:[#allocation2 + $0xd10] sm:$0xff]
        %v637 = vld [vmem:[#allocation2 + $0xd18] sm:$0xff]
        %v638 = vld [vmem:[#allocation2 + $0xd20] sm:$0xff]
        %v639 = vld [vmem:[#allocation2 + $0xd28] sm:$0xff]
        %v640 = vld [vmem:[#allocation2 + $0xd30] sm:$0xff]
        %v641 = vld [vmem:[#allocation2 + $0xd38] sm:$0xff]
        %v642 = vld [vmem:[#allocation2 + $0xd40] sm:$0xff]
        %v643 = vld [vmem:[#allocation2 + $0xd48] sm:$0xff]
        %v644 = vld [vmem:[#allocation2 + $0xd50] sm:$0xff]
        %v645 = vld [vmem:[#allocation2 + $0xd58] sm:$0xff]
        %v646 = vld [vmem:[#allocation2 + $0xd60] sm:$0xff]
        %v647 = vld [vmem:[#allocation2 + $0xd68] sm:$0xff]
        %v648 = vld [vmem:[#allocation2 + $0xd70] sm:$0xff]
        %v649 = vld [vmem:[#allocation2 + $0xd78] sm:$0xff]
        %v650 = vld [vmem:[#allocation2 + $0xd80] sm:$0xff]
        %v651 = vld [vmem:[#allocation2 + $0xd88] sm:$0xff]
        %v652 = vld [vmem:[#allocation2 + $0xd90] sm:$0xff]
        %v653 = vld [vmem:[#allocation2 + $0xd98] sm:$0xff]
        %v654 = vld [vmem:[#allocation2 + $0xda0] sm:$0xff]
        %v655 = vld [vmem:[#allocation2 + $0xda8] sm:$0xff]
        %v656 = vld [vmem:[#allocation2 + $0xdb0] sm:$0xff]
        %v657 = vld [vmem:[#allocation2 + $0xdb8] sm:$0xff]
        %v658 = vld [vmem:[#allocation2 + $0xdc0] sm:$0xff]
        %v659 = vld [vmem:[#allocation2 + $0xdc8] sm:$0xff]
        %v660 = vld [vmem:[#allocation2 + $0xdd0] sm:$0xff]
        %v661 = vld [vmem:[#allocation2 + $0xdd8] sm:$0xff]
        %v662 = vld [vmem:[#allocation2 + $0xde0] sm:$0xff]
        %v663 = vld [vmem:[#allocation2 + $0xde8] sm:$0xff]
        %v664 = vld [vmem:[#allocation2 + $0xdf0] sm:$0xff]
        %v665 = vld [vmem:[#allocation2 + $0xdf8] sm:$0xff]
        %v666 = vld [vmem:[#allocation2 + $0xe00] sm:$0xff]
        %v667 = vld [vmem:[#allocation2 + $0xe08] sm:$0xff]
        %v668 = vld [vmem:[#allocation2 + $0xe10] sm:$0xff]
        %v669 = vld [vmem:[#allocation2 + $0xe18] sm:$0xff]
        %v670 = vld [vmem:[#allocation2 + $0xe20] sm:$0xff]
        %v671 = vld [vmem:[#allocation2 + $0xe28] sm:$0xff]
        %v672 = vld [vmem:[#allocation2 + $0xe30] sm:$0xff]
        %v673 = vld [vmem:[#allocation2 + $0xe38] sm:$0xff]
        %v674 = vld [vmem:[#allocation2 + $0xe40] sm:$0xff]
        %v675 = vld [vmem:[#allocation2 + $0xe48] sm:$0xff]
        %v676 = vld [vmem:[#allocation2 + $0xe50] sm:$0xff]
        %v677 = vld [vmem:[#allocation2 + $0xe58] sm:$0xff]
        %v678 = vld [vmem:[#allocation2 + $0xe60] sm:$0xff]
        %v679 = vld [vmem:[#allocation2 + $0xe68] sm:$0xff]
        %v680 = vld [vmem:[#allocation2 + $0xe70] sm:$0xff]
        %v681 = vld [vmem:[#allocation2 + $0xe78] sm:$0xff]
        %v682 = vld [vmem:[#allocation2 + $0xe80] sm:$0xff]
        %v683 = vld [vmem:[#allocation2 + $0xe88] sm:$0xff]
        %v684 = vld [vmem:[#allocation2 + $0xe90] sm:$0xff]
        %v685 = vld [vmem:[#allocation2 + $0xe98] sm:$0xff]
        %v686 = vld [vmem:[#allocation2 + $0xea0] sm:$0xff]
        %v687 = vld [vmem:[#allocation2 + $0xea8] sm:$0xff]
        %v688 = vld [vmem:[#allocation2 + $0xeb0] sm:$0xff]
        %v689 = vld [vmem:[#allocation2 + $0xeb8] sm:$0xff]
        %v690 = vld [vmem:[#allocation2 + $0xec0] sm:$0xff]
        %v691 = vld [vmem:[#allocation2 + $0xec8] sm:$0xff]
        %v692 = vld [vmem:[#allocation2 + $0xed0] sm:$0xff]
        %v693 = vld [vmem:[#allocation2 + $0xed8] sm:$0xff]
        %v694 = vld [vmem:[#allocation2 + $0xee0] sm:$0xff]
        %v695 = vld [vmem:[#allocation2 + $0xee8] sm:$0xff]
        %v696 = vld [vmem:[#allocation2 + $0xef0] sm:$0xff]
        %v697 = vld [vmem:[#allocation2 + $0xef8] sm:$0xff]
        %v698 = vld [vmem:[#allocation2 + $0xf00] sm:$0xff]
        %v699 = vld [vmem:[#allocation2 + $0xf08] sm:$0xff]
        %v700 = vld [vmem:[#allocation2 + $0xf10] sm:$0xff]
        %v701 = vld [vmem:[#allocation2 + $0xf18] sm:$0xff]
        %v702 = vld [vmem:[#allocation2 + $0xf20] sm:$0xff]
        %v703 = vld [vmem:[#allocation2 + $0xf28] sm:$0xff]
        %v704 = vld [vmem:[#allocation2 + $0xf30] sm:$0xff]
        %v705 = vld [vmem:[#allocation2 + $0xf38] sm:$0xff]
        %v706 = vld [vmem:[#allocation2 + $0xf40] sm:$0xff]
        %v707 = vld [vmem:[#allocation2 + $0xf48] sm:$0xff]
        %v708 = vld [vmem:[#allocation2 + $0xf50] sm:$0xff]
        %v709 = vld [vmem:[#allocation2 + $0xf58] sm:$0xff]
        %v710 = vld [vmem:[#allocation2 + $0xf60] sm:$0xff]
        %v711 = vld [vmem:[#allocation2 + $0xf68] sm:$0xff]
        %v712 = vld [vmem:[#allocation2 + $0xf70] sm:$0xff]
        %v713 = vld [vmem:[#allocation2 + $0xf78] sm:$0xff]
        %v714 = vld [vmem:[#allocation2 + $0xf80] sm:$0xff]
        %v715 = vld [vmem:[#allocation2 + $0xf88] sm:$0xff]
        %v716 = vld [vmem:[#allocation2 + $0xf90] sm:$0xff]
        %v717 = vld [vmem:[#allocation2 + $0xf98] sm:$0xff]
        %v718 = vld [vmem:[#allocation2 + $0xfa0] sm:$0xff]
        %v719 = vld [vmem:[#allocation2 + $0xfa8] sm:$0xff]
        %v720 = vld [vmem:[#allocation2 + $0xfb0] sm:$0xff]
        %v721 = vld [vmem:[#allocation2 + $0xfb8] sm:$0xff]
        %v722 = vld [vmem:[#allocation5] sm:$0x3f]
        %v724 = vlaneseq
        %v725 = vshrl.u32 %v724, 7
        %v726 = vsub.s32 0, %v725
        %v727 = vrot.slane %v722, %v726
        %v728 = vlaneseq
        %v729 = vshrl.u32 %v728, 7
        %v730 = vsub.s32 1, %v729
        %v731 = vrot.slane %v722, %v730
        %v732 = vlaneseq
        %v733 = vshrl.u32 %v732, 7
        %v734 = vsub.s32 2, %v733
        %v735 = vrot.slane %v722, %v734
        %v736 = vlaneseq
        %v737 = vshrl.u32 %v736, 7
        %v738 = vsub.s32 3, %v737
        %v739 = vrot.slane %v722, %v738
        %v740 = vlaneseq
        %v741 = vshrl.u32 %v740, 7
        %v742 = vsub.s32 4, %v741
        %v743 = vrot.slane %v722, %v742
        %v744 = vlaneseq
        %v745 = vshrl.u32 %v744, 7
        %v746 = vsub.s32 5, %v745
        %v747 = vrot.slane %v722, %v746
        %vm754 = vcmask 261120
        %v756 = vsel %vm754, %v217, 0
        %758 = vmatprep.subr.mxu0 %v219
        %759 = vmatpush1.msra.mxu0 %v218
        %760 = vmatprep.subr.mxu0 %v225
        %761 = vmatpush1.msra.mxu0 %v224
        %762 = vmatprep.subr.mxu0 %v231
        %763 = vmatpush1.msra.mxu0 %v230
        %764 = vmatprep.subr.mxu0 %v237
        %765 = vmatpush1.msra.mxu0 %v236
        %766 = vmatprep.subr.mxu0 %v243
        %767 = vmatpush1.msra.mxu0 %v242
        %768 = vmatprep.subr.mxu0 %v249
        %769 = vmatpush1.msra.mxu0 %v248
        %770 = vmatprep.subr.mxu0 %v255
        %771 = vmatpush1.msra.mxu0 %v254
        %772 = vmatprep.subr.mxu0 %v261
        %773 = vmatpush1.msra.mxu0 %v260
        %774 = vmatprep.subr.mxu0 %v267
        %775 = vmatpush1.msra.mxu0 %v266
        %776 = vmatprep.subr.mxu0 %v273
        %777 = vmatpush1.msra.mxu0 %v272
        %778 = vmatprep.subr.mxu0 %v279
        %779 = vmatpush1.msra.mxu0 %v278
        %780 = vmatprep.subr.mxu0 %v285
        %781 = vmatpush1.msra.mxu0 %v284
        %782 = vmatprep.subr.mxu0 %v291
        %783 = vmatpush1.msra.mxu0 %v290
        %784 = vmatprep.subr.mxu0 %v297
        %785 = vmatpush1.msra.mxu0 %v296
        %786 = vmatprep.subr.mxu0 %v303
        %787 = vmatpush1.msra.mxu0 %v302
        %788 = vmatprep.subr.mxu0 %v309
        %789 = vmatpush1.msra.mxu0 %v308
        %790 = vmatprep.subr.mxu0 %v315
        %791 = vmatpush1.msra.mxu0 %v314
        %792 = vmatprep.subr.mxu0 %v321
        %793 = vmatpush1.msra.mxu0 %v320
        %794 = vmatprep.subr.mxu0 %v327
        %795 = vmatpush1.msra.mxu0 %v326
        %796 = vmatprep.subr.mxu0 %v333
        %797 = vmatpush1.msra.mxu0 %v332
        %798 = vmatprep.subr.mxu0 %v339
        %799 = vmatpush1.msra.mxu0 %v338
        %800 = vmatprep.subr.mxu0 %v345
        %801 = vmatpush1.msra.mxu0 %v344
        %802 = vmatprep.subr.mxu0 %v351
        %803 = vmatpush1.msra.mxu0 %v350
        %804 = vmatprep.subr.mxu0 %v357
        %805 = vmatpush1.msra.mxu0 %v356
        %806 = vmatprep.subr.mxu0 %v363
        %807 = vmatpush1.msra.mxu0 %v362
        %808 = vmatprep.subr.mxu0 %v369
        %809 = vmatpush1.msra.mxu0 %v368
        %810 = vmatprep.subr.mxu0 %v375
        %811 = vmatpush1.msra.mxu0 %v374
        %812 = vmatprep.subr.mxu0 %v381
        %813 = vmatpush1.msra.mxu0 %v380
        %814 = vmatprep.subr.mxu0 %v387
        %815 = vmatpush1.msra.mxu0 %v386
        %816 = vmatprep.subr.mxu0 %v393
        %817 = vmatpush1.msra.mxu0 %v392
        %818 = vmatprep.subr.mxu0 %v399
        %819 = vmatpush1.msra.mxu0 %v398
        %820 = vmatprep.subr.mxu0 %v405
        %821 = vmatpush1.msra.mxu0 %v404
        %822 = vmatprep.mubr.f32.mxu0 %v213
        %823 = vmatmul.mubr.f32.gmra.mrb[0].mxu0 %v212
        %v824 = vpop.f32.mrb[0].mxu0
        %v825 = vadd.f32 %v727, %v824
        %v826 = vpop.f32.mrb[0].mxu0
        %v827 = vadd.f32 %v731, %v826
        %828 = vdwg.mxu0
        %829 = vmatprep.subr.mxu0 %v411
        %830 = vmatpush1.msra.mxu0 %v410
        %831 = vmatprep.subr.mxu0 %v417
        %832 = vmatpush1.msra.mxu0 %v416
        %833 = vmatprep.subr.mxu0 %v423
        %834 = vmatpush1.msra.mxu0 %v422
        %835 = vmatprep.subr.mxu0 %v429
        %836 = vmatpush1.msra.mxu0 %v428
        %837 = vmatprep.subr.mxu0 %v435
        %838 = vmatpush1.msra.mxu0 %v434
        %839 = vmatprep.subr.mxu0 %v441
        %840 = vmatpush1.msra.mxu0 %v440
        %841 = vmatprep.subr.mxu0 %v447
        %842 = vmatpush1.msra.mxu0 %v446
        %843 = vmatprep.subr.mxu0 %v453
        %844 = vmatpush1.msra.mxu0 %v452
        %845 = vmatprep.subr.mxu0 %v459
        %846 = vmatpush1.msra.mxu0 %v458
        %847 = vmatprep.subr.mxu0 %v465
        %848 = vmatpush1.msra.mxu0 %v464
        %849 = vmatprep.subr.mxu0 %v471
        %850 = vmatpush1.msra.mxu0 %v470
        %851 = vmatprep.subr.mxu0 %v477
        %852 = vmatpush1.msra.mxu0 %v476
        %853 = vmatprep.subr.mxu0 %v483
        %854 = vmatpush1.msra.mxu0 %v482
        %855 = vmatprep.subr.mxu0 %v489
        %856 = vmatpush1.msra.mxu0 %v488
        %857 = vmatprep.subr.mxu0 %v495
        %858 = vmatpush1.msra.mxu0 %v494
        %859 = vmatprep.subr.mxu0 %v501
        %860 = vmatpush1.msra.mxu0 %v500
        %861 = vmatprep.subr.mxu0 %v507
        %862 = vmatpush1.msra.mxu0 %v506
        %863 = vmatprep.subr.mxu0 %v513
        %864 = vmatpush1.msra.mxu0 %v512
        %865 = vmatprep.subr.mxu0 %v519
        %866 = vmatpush1.msra.mxu0 %v518
        %867 = vmatprep.subr.mxu0 %v525
        %868 = vmatpush1.msra.mxu0 %v524
        %869 = vmatprep.subr.mxu0 %v531
        %870 = vmatpush1.msra.mxu0 %v530
        %871 = vmatprep.subr.mxu0 %v537
        %872 = vmatpush1.msra.mxu0 %v536
        %873 = vmatprep.subr.mxu0 %v543
        %874 = vmatpush1.msra.mxu0 %v542
        %875 = vmatprep.subr.mxu0 %v549
        %876 = vmatpush1.msra.mxu0 %v548
        %877 = vmatprep.subr.mxu0 %v555
        %878 = vmatpush1.msra.mxu0 %v554
        %879 = vmatprep.subr.mxu0 %v561
        %880 = vmatpush1.msra.mxu0 %v560
        %881 = vmatprep.subr.mxu0 %v567
        %882 = vmatpush1.msra.mxu0 %v566
        %883 = vmatprep.subr.mxu0 %v573
        %884 = vmatpush1.msra.mxu0 %v572
        %885 = vmatprep.subr.mxu0 %v579
        %886 = vmatpush1.msra.mxu0 %v578
        %887 = vmatprep.subr.mxu0 %v585
        %888 = vmatpush1.msra.mxu0 %v584
        %889 = vmatprep.subr.mxu0 %v591
        %890 = vmatpush1.msra.mxu0 %v590
        %891 = vmatprep.subr.mxu0 %v597
        %892 = vmatpush1.msra.mxu0 %v596
        %893 = vmatprep.mubr.f32.mxu0 %v215
        %894 = vmatmul.mubr.f32.gmra.mrb[0].mxu0 %v214
        %v895 = vpop.f32.mrb[0].mxu0
        %v896 = vadd.f32 %v825, %v895
        %v897 = vpop.f32.mrb[0].mxu0
        %v898 = vadd.f32 %v827, %v897
        %899 = vdwg.mxu0
        %900 = vmatprep.subr.mxu0 %v603
        %901 = vmatpush1.msra.mxu0 %v602
        %902 = vmatprep.subr.mxu0 %v609
        %903 = vmatpush1.msra.mxu0 %v608
        %904 = vmatprep.subr.mxu0 %v615
        %905 = vmatpush1.msra.mxu0 %v614
        %906 = vmatprep.subr.mxu0 %v621
        %907 = vmatpush1.msra.mxu0 %v620
        %908 = vmatprep.subr.mxu0 %v627
        %909 = vmatpush1.msra.mxu0 %v626
        %910 = vmatprep.subr.mxu0 %v633
        %911 = vmatpush1.msra.mxu0 %v632
        %912 = vmatprep.subr.mxu0 %v639
        %913 = vmatpush1.msra.mxu0 %v638
        %914 = vmatprep.subr.mxu0 %v645
        %915 = vmatpush1.msra.mxu0 %v644
        %916 = vmatprep.subr.mxu0 %v651
        %917 = vmatpush1.msra.mxu0 %v650
        %918 = vmatprep.subr.mxu0 %v657
        %919 = vmatpush1.msra.mxu0 %v656
        %920 = vmatprep.subr.mxu0 %v663
        %921 = vmatpush1.msra.mxu0 %v662
        %922 = vmatprep.subr.mxu0 %v669
        %923 = vmatpush1.msra.mxu0 %v668
        %924 = vmatprep.subr.mxu0 %v675
        %925 = vmatpush1.msra.mxu0 %v674
        %926 = vmatprep.subr.mxu0 %v681
        %927 = vmatpush1.msra.mxu0 %v680
        %928 = vmatprep.subr.mxu0 %v687
        %929 = vmatpush1.msra.mxu0 %v686
        %930 = vmatprep.subr.mxu0 %v693
        %931 = vmatpush1.msra.mxu0 %v692
        %932 = vmatprep.subr.mxu0 %v699
        %933 = vmatpush1.msra.mxu0 %v698
        %934 = vmatprep.subr.mxu0 %v705
        %935 = vmatpush1.msra.mxu0 %v704
        %936 = vmatprep.subr.mxu0 %v711
        %937 = vmatpush1.msra.mxu0 %v710
        %938 = vmatprep.subr.mxu0 %v717
        %939 = vmatpush1.msra.mxu0 %v716
        %940 = vmatprep.subr.mxu0 0.0
        %941 = vmatpush1.msra.mxu0 0.0
        %942 = vmatprep.subr.mxu0 0.0
        %943 = vmatpush1.msra.mxu0 0.0
        %944 = vmatprep.subr.mxu0 0.0
        %945 = vmatpush1.msra.mxu0 0.0
        %946 = vmatprep.subr.mxu0 0.0
        %947 = vmatpush1.msra.mxu0 0.0
        %948 = vmatprep.subr.mxu0 0.0
        %949 = vmatpush1.msra.mxu0 0.0
        %950 = vmatprep.subr.mxu0 0.0
        %951 = vmatpush1.msra.mxu0 0.0
        %952 = vmatprep.subr.mxu0 0.0
        %953 = vmatpush1.msra.mxu0 0.0
        %954 = vmatprep.subr.mxu0 0.0
        %955 = vmatpush1.msra.mxu0 0.0
        %956 = vmatprep.subr.mxu0 0.0
        %957 = vmatpush1.msra.mxu0 0.0
        %958 = vmatprep.subr.mxu0 0.0
        %959 = vmatpush1.msra.mxu0 0.0
        %960 = vmatprep.subr.mxu0 0.0
        %961 = vmatpush1.msra.mxu0 0.0
        %962 = vmatprep.subr.mxu0 0.0
        %963 = vmatpush1.msra.mxu0 0.0
        %964 = vmatprep.mubr.f32.mxu0 %v756
        %965 = vmatmul.mubr.f32.gmra.mrb[0].mxu0 %v216
        %v966 = vpop.f32.mrb[0].mxu0
        %v967 = vadd.f32 %v896, %v966
        %v968 = vpop.f32.mrb[0].mxu0
        %v969 = vadd.f32 %v898, %v968
        %970 = vdwg.mxu0
        %971 = vmatprep.subr.mxu0 %v221
        %972 = vmatpush1.msra.mxu0 %v220
        %973 = vmatprep.subr.mxu0 %v227
        %974 = vmatpush1.msra.mxu0 %v226
        %975 = vmatprep.subr.mxu0 %v233
        %976 = vmatpush1.msra.mxu0 %v232
        %977 = vmatprep.subr.mxu0 %v239
        %978 = vmatpush1.msra.mxu0 %v238
        %979 = vmatprep.subr.mxu0 %v245
        %980 = vmatpush1.msra.mxu0 %v244
        %981 = vmatprep.subr.mxu0 %v251
        %982 = vmatpush1.msra.mxu0 %v250
        %983 = vmatprep.subr.mxu0 %v257
        %984 = vmatpush1.msra.mxu0 %v256
        %985 = vmatprep.subr.mxu0 %v263
        %986 = vmatpush1.msra.mxu0 %v262
        %987 = vmatprep.subr.mxu0 %v269
        %988 = vmatpush1.msra.mxu0 %v268
        %989 = vmatprep.subr.mxu0 %v275
        %990 = vmatpush1.msra.mxu0 %v274
        %991 = vmatprep.subr.mxu0 %v281
        %992 = vmatpush1.msra.mxu0 %v280
        %993 = vmatprep.subr.mxu0 %v287
        %994 = vmatpush1.msra.mxu0 %v286
        %995 = vmatprep.subr.mxu0 %v293
        %996 = vmatpush1.msra.mxu0 %v292
        %997 = vmatprep.subr.mxu0 %v299
        %998 = vmatpush1.msra.mxu0 %v298
        %999 = vmatprep.subr.mxu0 %v305
        %1000 = vmatpush1.msra.mxu0 %v304
        %1001 = vmatprep.subr.mxu0 %v311
        %1002 = vmatpush1.msra.mxu0 %v310
        %1003 = vmatprep.subr.mxu0 %v317
        %1004 = vmatpush1.msra.mxu0 %v316
        %1005 = vmatprep.subr.mxu0 %v323
        %1006 = vmatpush1.msra.mxu0 %v322
        %1007 = vmatprep.subr.mxu0 %v329
        %1008 = vmatpush1.msra.mxu0 %v328
        %1009 = vmatprep.subr.mxu0 %v335
        %1010 = vmatpush1.msra.mxu0 %v334
        %1011 = vmatprep.subr.mxu0 %v341
        %1012 = vmatpush1.msra.mxu0 %v340
        %1013 = vmatprep.subr.mxu0 %v347
        %1014 = vmatpush1.msra.mxu0 %v346
        %1015 = vmatprep.subr.mxu0 %v353
        %1016 = vmatpush1.msra.mxu0 %v352
        %1017 = vmatprep.subr.mxu0 %v359
        %1018 = vmatpush1.msra.mxu0 %v358
        %1019 = vmatprep.subr.mxu0 %v365
        %1020 = vmatpush1.msra.mxu0 %v364
        %1021 = vmatprep.subr.mxu0 %v371
        %1022 = vmatpush1.msra.mxu0 %v370
        %1023 = vmatprep.subr.mxu0 %v377
        %1024 = vmatpush1.msra.mxu0 %v376
        %1025 = vmatprep.subr.mxu0 %v383
        %1026 = vmatpush1.msra.mxu0 %v382
        %1027 = vmatprep.subr.mxu0 %v389
        %1028 = vmatpush1.msra.mxu0 %v388
        %1029 = vmatprep.subr.mxu0 %v395
        %1030 = vmatpush1.msra.mxu0 %v394
        %1031 = vmatprep.subr.mxu0 %v401
        %1032 = vmatpush1.msra.mxu0 %v400
        %1033 = vmatprep.subr.mxu0 %v407
        %1034 = vmatpush1.msra.mxu0 %v406
        %1035 = vmatprep.mubr.f32.mxu0 %v213
        %1036 = vmatmul.mubr.f32.gmra.mrb[0].mxu0 %v212
        %v1037 = vpop.f32.mrb[0].mxu0
        %v1038 = vadd.f32 %v735, %v1037
        %v1039 = vpop.f32.mrb[0].mxu0
        %v1040 = vadd.f32 %v739, %v1039
        %1041 = vdwg.mxu0
        %1042 = vmatprep.subr.mxu0 %v413
        %1043 = vmatpush1.msra.mxu0 %v412
        %1044 = vmatprep.subr.mxu0 %v419
        %1045 = vmatpush1.msra.mxu0 %v418
        %1046 = vmatprep.subr.mxu0 %v425
        %1047 = vmatpush1.msra.mxu0 %v424
        %1048 = vmatprep.subr.mxu0 %v431
        %1049 = vmatpush1.msra.mxu0 %v430
        %1050 = vmatprep.subr.mxu0 %v437
        %1051 = vmatpush1.msra.mxu0 %v436
        %1052 = vmatprep.subr.mxu0 %v443
        %1053 = vmatpush1.msra.mxu0 %v442
        %1054 = vmatprep.subr.mxu0 %v449
        %1055 = vmatpush1.msra.mxu0 %v448
        %1056 = vmatprep.subr.mxu0 %v455
        %1057 = vmatpush1.msra.mxu0 %v454
        %1058 = vmatprep.subr.mxu0 %v461
        %1059 = vmatpush1.msra.mxu0 %v460
        %1060 = vmatprep.subr.mxu0 %v467
        %1061 = vmatpush1.msra.mxu0 %v466
        %1062 = vmatprep.subr.mxu0 %v473
        %1063 = vmatpush1.msra.mxu0 %v472
        %1064 = vmatprep.subr.mxu0 %v479
        %1065 = vmatpush1.msra.mxu0 %v478
        %1066 = vmatprep.subr.mxu0 %v485
        %1067 = vmatpush1.msra.mxu0 %v484
        %1068 = vmatprep.subr.mxu0 %v491
        %1069 = vmatpush1.msra.mxu0 %v490
        %1070 = vmatprep.subr.mxu0 %v497
        %1071 = vmatpush1.msra.mxu0 %v496
        %1072 = vmatprep.subr.mxu0 %v503
        %1073 = vmatpush1.msra.mxu0 %v502
        %1074 = vmatprep.subr.mxu0 %v509
        %1075 = vmatpush1.msra.mxu0 %v508
        %1076 = vmatprep.subr.mxu0 %v515
        %1077 = vmatpush1.msra.mxu0 %v514
        %1078 = vmatprep.subr.mxu0 %v521
        %1079 = vmatpush1.msra.mxu0 %v520
        %1080 = vmatprep.subr.mxu0 %v527
        %1081 = vmatpush1.msra.mxu0 %v526
        %1082 = vmatprep.subr.mxu0 %v533
        %1083 = vmatpush1.msra.mxu0 %v532
        %1084 = vmatprep.subr.mxu0 %v539
        %1085 = vmatpush1.msra.mxu0 %v538
        %1086 = vmatprep.subr.mxu0 %v545
        %1087 = vmatpush1.msra.mxu0 %v544
        %1088 = vmatprep.subr.mxu0 %v551
        %1089 = vmatpush1.msra.mxu0 %v550
        %1090 = vmatprep.subr.mxu0 %v557
        %1091 = vmatpush1.msra.mxu0 %v556
        %1092 = vmatprep.subr.mxu0 %v563
        %1093 = vmatpush1.msra.mxu0 %v562
        %1094 = vmatprep.subr.mxu0 %v569
        %1095 = vmatpush1.msra.mxu0 %v568
        %1096 = vmatprep.subr.mxu0 %v575
        %1097 = vmatpush1.msra.mxu0 %v574
        %1098 = vmatprep.subr.mxu0 %v581
        %1099 = vmatpush1.msra.mxu0 %v580
        %1100 = vmatprep.subr.mxu0 %v587
        %1101 = vmatpush1.msra.mxu0 %v586
        %1102 = vmatprep.subr.mxu0 %v593
        %1103 = vmatpush1.msra.mxu0 %v592
        %1104 = vmatprep.subr.mxu0 %v599
        %1105 = vmatpush1.msra.mxu0 %v598
        %1106 = vmatprep.mubr.f32.mxu0 %v215
        %1107 = vmatmul.mubr.f32.gmra.mrb[0].mxu0 %v214
        %v1108 = vpop.f32.mrb[0].mxu0
        %v1109 = vadd.f32 %v1038, %v1108
        %v1110 = vpop.f32.mrb[0].mxu0
        %v1111 = vadd.f32 %v1040, %v1110
        %1112 = vdwg.mxu0
        %1113 = vmatprep.subr.mxu0 %v605
        %1114 = vmatpush1.msra.mxu0 %v604
        %1115 = vmatprep.subr.mxu0 %v611
        %1116 = vmatpush1.msra.mxu0 %v610
        %1117 = vmatprep.subr.mxu0 %v617
        %1118 = vmatpush1.msra.mxu0 %v616
        %1119 = vmatprep.subr.mxu0 %v623
        %1120 = vmatpush1.msra.mxu0 %v622
        %1121 = vmatprep.subr.mxu0 %v629
        %1122 = vmatpush1.msra.mxu0 %v628
        %1123 = vmatprep.subr.mxu0 %v635
        %1124 = vmatpush1.msra.mxu0 %v634
        %1125 = vmatprep.subr.mxu0 %v641
        %1126 = vmatpush1.msra.mxu0 %v640
        %1127 = vmatprep.subr.mxu0 %v647
        %1128 = vmatpush1.msra.mxu0 %v646
        %1129 = vmatprep.subr.mxu0 %v653
        %1130 = vmatpush1.msra.mxu0 %v652
        %1131 = vmatprep.subr.mxu0 %v659
        %1132 = vmatpush1.msra.mxu0 %v658
        %1133 = vmatprep.subr.mxu0 %v665
        %1134 = vmatpush1.msra.mxu0 %v664
        %1135 = vmatprep.subr.mxu0 %v671
        %1136 = vmatpush1.msra.mxu0 %v670
        %1137 = vmatprep.subr.mxu0 %v677
        %1138 = vmatpush1.msra.mxu0 %v676
        %1139 = vmatprep.subr.mxu0 %v683
        %1140 = vmatpush1.msra.mxu0 %v682
        %1141 = vmatprep.subr.mxu0 %v689
        %1142 = vmatpush1.msra.mxu0 %v688
        %1143 = vmatprep.subr.mxu0 %v695
        %1144 = vmatpush1.msra.mxu0 %v694
        %1145 = vmatprep.subr.mxu0 %v701
        %1146 = vmatpush1.msra.mxu0 %v700
        %1147 = vmatprep.subr.mxu0 %v707
        %1148 = vmatpush1.msra.mxu0 %v706
        %1149 = vmatprep.subr.mxu0 %v713
        %1150 = vmatpush1.msra.mxu0 %v712
        %1151 = vmatprep.subr.mxu0 %v719
        %1152 = vmatpush1.msra.mxu0 %v718
        %1153 = vmatprep.subr.mxu0 0.0
        %1154 = vmatpush1.msra.mxu0 0.0
        %1155 = vmatprep.subr.mxu0 0.0
        %1156 = vmatpush1.msra.mxu0 0.0
        %1157 = vmatprep.subr.mxu0 0.0
        %1158 = vmatpush1.msra.mxu0 0.0
        %1159 = vmatprep.subr.mxu0 0.0
        %1160 = vmatpush1.msra.mxu0 0.0
        %1161 = vmatprep.subr.mxu0 0.0
        %1162 = vmatpush1.msra.mxu0 0.0
        %1163 = vmatprep.subr.mxu0 0.0
        %1164 = vmatpush1.msra.mxu0 0.0
        %1165 = vmatprep.subr.mxu0 0.0
        %1166 = vmatpush1.msra.mxu0 0.0
        %1167 = vmatprep.subr.mxu0 0.0
        %1168 = vmatpush1.msra.mxu0 0.0
        %1169 = vmatprep.subr.mxu0 0.0
        %1170 = vmatpush1.msra.mxu0 0.0
        %1171 = vmatprep.subr.mxu0 0.0
        %1172 = vmatpush1.msra.mxu0 0.0
        %1173 = vmatprep.subr.mxu0 0.0
        %1174 = vmatpush1.msra.mxu0 0.0
        %1175 = vmatprep.subr.mxu0 0.0
        %1176 = vmatpush1.msra.mxu0 0.0
        %1177 = vmatprep.mubr.f32.mxu0 %v756
        %1178 = vmatmul.mubr.f32.gmra.mrb[0].mxu0 %v216
        %v1179 = vpop.f32.mrb[0].mxu0
        %v1180 = vadd.f32 %v1109, %v1179
        %v1181 = vpop.f32.mrb[0].mxu0
        %v1182 = vadd.f32 %v1111, %v1181
        %1183 = vdwg.mxu0
        %1184 = vmatprep.subr.mxu0 %v223
        %1185 = vmatpush1.msra.mxu0 %v222
        %1186 = vmatprep.subr.mxu0 %v229
        %1187 = vmatpush1.msra.mxu0 %v228
        %1188 = vmatprep.subr.mxu0 %v235
        %1189 = vmatpush1.msra.mxu0 %v234
        %1190 = vmatprep.subr.mxu0 %v241
        %1191 = vmatpush1.msra.mxu0 %v240
        %1192 = vmatprep.subr.mxu0 %v247
        %1193 = vmatpush1.msra.mxu0 %v246
        %1194 = vmatprep.subr.mxu0 %v253
        %1195 = vmatpush1.msra.mxu0 %v252
        %1196 = vmatprep.subr.mxu0 %v259
        %1197 = vmatpush1.msra.mxu0 %v258
        %1198 = vmatprep.subr.mxu0 %v265
        %1199 = vmatpush1.msra.mxu0 %v264
        %1200 = vmatprep.subr.mxu0 %v271
        %1201 = vmatpush1.msra.mxu0 %v270
        %1202 = vmatprep.subr.mxu0 %v277
        %1203 = vmatpush1.msra.mxu0 %v276
        %1204 = vmatprep.subr.mxu0 %v283
        %1205 = vmatpush1.msra.mxu0 %v282
        %1206 = vmatprep.subr.mxu0 %v289
        %1207 = vmatpush1.msra.mxu0 %v288
        %1208 = vmatprep.subr.mxu0 %v295
        %1209 = vmatpush1.msra.mxu0 %v294
        %1210 = vmatprep.subr.mxu0 %v301
        %1211 = vmatpush1.msra.mxu0 %v300
        %1212 = vmatprep.subr.mxu0 %v307
        %1213 = vmatpush1.msra.mxu0 %v306
        %1214 = vmatprep.subr.mxu0 %v313
        %1215 = vmatpush1.msra.mxu0 %v312
        %1216 = vmatprep.subr.mxu0 %v319
        %1217 = vmatpush1.msra.mxu0 %v318
        %1218 = vmatprep.subr.mxu0 %v325
        %1219 = vmatpush1.msra.mxu0 %v324
        %1220 = vmatprep.subr.mxu0 %v331
        %1221 = vmatpush1.msra.mxu0 %v330
        %1222 = vmatprep.subr.mxu0 %v337
        %1223 = vmatpush1.msra.mxu0 %v336
        %1224 = vmatprep.subr.mxu0 %v343
        %1225 = vmatpush1.msra.mxu0 %v342
        %1226 = vmatprep.subr.mxu0 %v349
        %1227 = vmatpush1.msra.mxu0 %v348
        %1228 = vmatprep.subr.mxu0 %v355
        %1229 = vmatpush1.msra.mxu0 %v354
        %1230 = vmatprep.subr.mxu0 %v361
        %1231 = vmatpush1.msra.mxu0 %v360
        %1232 = vmatprep.subr.mxu0 %v367
        %1233 = vmatpush1.msra.mxu0 %v366
        %1234 = vmatprep.subr.mxu0 %v373
        %1235 = vmatpush1.msra.mxu0 %v372
        %1236 = vmatprep.subr.mxu0 %v379
        %1237 = vmatpush1.msra.mxu0 %v378
        %1238 = vmatprep.subr.mxu0 %v385
        %1239 = vmatpush1.msra.mxu0 %v384
        %1240 = vmatprep.subr.mxu0 %v391
        %1241 = vmatpush1.msra.mxu0 %v390
        %1242 = vmatprep.subr.mxu0 %v397
        %1243 = vmatpush1.msra.mxu0 %v396
        %1244 = vmatprep.subr.mxu0 %v403
        %1245 = vmatpush1.msra.mxu0 %v402
        %1246 = vmatprep.subr.mxu0 %v409
        %1247 = vmatpush1.msra.mxu0 %v408
        %1248 = vmatprep.mubr.f32.mxu0 %v213
        %1249 = vmatmul.mubr.f32.gmra.mrb[0].mxu0 %v212
        %v1250 = vpop.f32.mrb[0].mxu0
        %v1251 = vadd.f32 %v743, %v1250
        %v1252 = vpop.f32.mrb[0].mxu0
        %v1253 = vadd.f32 %v747, %v1252
        %1254 = vdwg.mxu0
        %1255 = vmatprep.subr.mxu0 %v415
        %1256 = vmatpush1.msra.mxu0 %v414
        %1257 = vmatprep.subr.mxu0 %v421
        %1258 = vmatpush1.msra.mxu0 %v420
        %1259 = vmatprep.subr.mxu0 %v427
        %1260 = vmatpush1.msra.mxu0 %v426
        %1261 = vmatprep.subr.mxu0 %v433
        %1262 = vmatpush1.msra.mxu0 %v432
        %1263 = vmatprep.subr.mxu0 %v439
        %1264 = vmatpush1.msra.mxu0 %v438
        %1265 = vmatprep.subr.mxu0 %v445
        %1266 = vmatpush1.msra.mxu0 %v444
        %1267 = vmatprep.subr.mxu0 %v451
        %1268 = vmatpush1.msra.mxu0 %v450
        %1269 = vmatprep.subr.mxu0 %v457
        %1270 = vmatpush1.msra.mxu0 %v456
        %1271 = vmatprep.subr.mxu0 %v463
        %1272 = vmatpush1.msra.mxu0 %v462
        %1273 = vmatprep.subr.mxu0 %v469
        %1274 = vmatpush1.msra.mxu0 %v468
        %1275 = vmatprep.subr.mxu0 %v475
        %1276 = vmatpush1.msra.mxu0 %v474
        %1277 = vmatprep.subr.mxu0 %v481
        %1278 = vmatpush1.msra.mxu0 %v480
        %1279 = vmatprep.subr.mxu0 %v487
        %1280 = vmatpush1.msra.mxu0 %v486
        %1281 = vmatprep.subr.mxu0 %v493
        %1282 = vmatpush1.msra.mxu0 %v492
        %1283 = vmatprep.subr.mxu0 %v499
        %1284 = vmatpush1.msra.mxu0 %v498
        %1285 = vmatprep.subr.mxu0 %v505
        %1286 = vmatpush1.msra.mxu0 %v504
        %1287 = vmatprep.subr.mxu0 %v511
        %1288 = vmatpush1.msra.mxu0 %v510
        %1289 = vmatprep.subr.mxu0 %v517
        %1290 = vmatpush1.msra.mxu0 %v516
        %1291 = vmatprep.subr.mxu0 %v523
        %1292 = vmatpush1.msra.mxu0 %v522
        %1293 = vmatprep.subr.mxu0 %v529
        %1294 = vmatpush1.msra.mxu0 %v528
        %1295 = vmatprep.subr.mxu0 %v535
        %1296 = vmatpush1.msra.mxu0 %v534
        %1297 = vmatprep.subr.mxu0 %v541
        %1298 = vmatpush1.msra.mxu0 %v540
        %1299 = vmatprep.subr.mxu0 %v547
        %1300 = vmatpush1.msra.mxu0 %v546
        %1301 = vmatprep.subr.mxu0 %v553
        %1302 = vmatpush1.msra.mxu0 %v552
        %1303 = vmatprep.subr.mxu0 %v559
        %1304 = vmatpush1.msra.mxu0 %v558
        %1305 = vmatprep.subr.mxu0 %v565
        %1306 = vmatpush1.msra.mxu0 %v564
        %1307 = vmatprep.subr.mxu0 %v571
        %1308 = vmatpush1.msra.mxu0 %v570
        %1309 = vmatprep.subr.mxu0 %v577
        %1310 = vmatpush1.msra.mxu0 %v576
        %1311 = vmatprep.subr.mxu0 %v583
        %1312 = vmatpush1.msra.mxu0 %v582
        %1313 = vmatprep.subr.mxu0 %v589
        %1314 = vmatpush1.msra.mxu0 %v588
        %1315 = vmatprep.subr.mxu0 %v595
        %1316 = vmatpush1.msra.mxu0 %v594
        %1317 = vmatprep.subr.mxu0 %v601
        %1318 = vmatpush1.msra.mxu0 %v600
        %1319 = vmatprep.mubr.f32.mxu0 %v215
        %1320 = vmatmul.mubr.f32.gmra.mrb[0].mxu0 %v214
        %v1321 = vpop.f32.mrb[0].mxu0
        %v1322 = vadd.f32 %v1251, %v1321
        %v1323 = vpop.f32.mrb[0].mxu0
        %v1324 = vadd.f32 %v1253, %v1323
        %1325 = vdwg.mxu0
        %1326 = vmatprep.subr.mxu0 %v607
        %1327 = vmatpush1.msra.mxu0 %v606
        %1328 = vmatprep.subr.mxu0 %v613
        %1329 = vmatpush1.msra.mxu0 %v612
        %1330 = vmatprep.subr.mxu0 %v619
        %1331 = vmatpush1.msra.mxu0 %v618
        %1332 = vmatprep.subr.mxu0 %v625
        %1333 = vmatpush1.msra.mxu0 %v624
        %1334 = vmatprep.subr.mxu0 %v631
        %1335 = vmatpush1.msra.mxu0 %v630
        %1336 = vmatprep.subr.mxu0 %v637
        %1337 = vmatpush1.msra.mxu0 %v636
        %1338 = vmatprep.subr.mxu0 %v643
        %1339 = vmatpush1.msra.mxu0 %v642
        %1340 = vmatprep.subr.mxu0 %v649
        %1341 = vmatpush1.msra.mxu0 %v648
        %1342 = vmatprep.subr.mxu0 %v655
        %1343 = vmatpush1.msra.mxu0 %v654
        %1344 = vmatprep.subr.mxu0 %v661
        %1345 = vmatpush1.msra.mxu0 %v660
        %1346 = vmatprep.subr.mxu0 %v667
        %1347 = vmatpush1.msra.mxu0 %v666
        %1348 = vmatprep.subr.mxu0 %v673
        %1349 = vmatpush1.msra.mxu0 %v672
        %1350 = vmatprep.subr.mxu0 %v679
        %1351 = vmatpush1.msra.mxu0 %v678
        %1352 = vmatprep.subr.mxu0 %v685
        %1353 = vmatpush1.msra.mxu0 %v684
        %1354 = vmatprep.subr.mxu0 %v691
        %1355 = vmatpush1.msra.mxu0 %v690
        %1356 = vmatprep.subr.mxu0 %v697
        %1357 = vmatpush1.msra.mxu0 %v696
        %1358 = vmatprep.subr.mxu0 %v703
        %1359 = vmatpush1.msra.mxu0 %v702
        %1360 = vmatprep.subr.mxu0 %v709
        %1361 = vmatpush1.msra.mxu0 %v708
        %1362 = vmatprep.subr.mxu0 %v715
        %1363 = vmatpush1.msra.mxu0 %v714
        %1364 = vmatprep.subr.mxu0 %v721
        %1365 = vmatpush1.msra.mxu0 %v720
        %1366 = vmatprep.subr.mxu0 0.0
        %1367 = vmatpush1.msra.mxu0 0.0
        %1368 = vmatprep.subr.mxu0 0.0
        %1369 = vmatpush1.msra.mxu0 0.0
        %1370 = vmatprep.subr.mxu0 0.0
        %1371 = vmatpush1.msra.mxu0 0.0
        %1372 = vmatprep.subr.mxu0 0.0
        %1373 = vmatpush1.msra.mxu0 0.0
        %1374 = vmatprep.subr.mxu0 0.0
        %1375 = vmatpush1.msra.mxu0 0.0
        %1376 = vmatprep.subr.mxu0 0.0
        %1377 = vmatpush1.msra.mxu0 0.0
        %1378 = vmatprep.subr.mxu0 0.0
        %1379 = vmatpush1.msra.mxu0 0.0
        %1380 = vmatprep.subr.mxu0 0.0
        %1381 = vmatpush1.msra.mxu0 0.0
        %1382 = vmatprep.subr.mxu0 0.0
        %1383 = vmatpush1.msra.mxu0 0.0
        %1384 = vmatprep.subr.mxu0 0.0
        %1385 = vmatpush1.msra.mxu0 0.0
        %1386 = vmatprep.subr.mxu0 0.0
        %1387 = vmatpush1.msra.mxu0 0.0
        %1388 = vmatprep.subr.mxu0 0.0
        %1389 = vmatpush1.msra.mxu0 0.0
        %1390 = vmatprep.mubr.f32.mxu0 %v756
        %1391 = vmatmul.mubr.f32.gmra.mrb[0].mxu0 %v216
        %v1392 = vpop.f32.mrb[0].mxu0
        %v1393 = vadd.f32 %v1322, %v1392
        %v1394 = vpop.f32.mrb[0].mxu0
        %v1395 = vadd.f32 %v1324, %v1394
        %1396 = vdwg.mxu0
        %1397 = vst [vmem:[%s211] sm:$0xff] %v967
        %1398 = vst [vmem:[%s211 + $0x8] sm:$0xff] %v969
        %1399 = vst [vmem:[%s211 + $0x10] sm:$0xff] %v1180
        %1400 = vst [vmem:[%s211 + $0x18] sm:$0xff] %v1182
        %1401 = vst [vmem:[%s211 + $0x20] sm:$0xff] %v1393
        %1402 = vst.msk [vmem:[%s211 + $0x28] sm:$0xff] %vm754, %v1395
        %s1403 = sand.u32 %s95, 1
        %s1404 = scalar_lea.sflag [#allocation4], %s1403
        %s1405 = sand.u32 %s95, 1
        %s1406 = smul.addr %s1405, 48
        %s1407 = scalar_lea.vmem [#allocation8], %s1406
        // Predicated region
        $region45: #{tpu_custom_call.1} parent=31 // pred_check
          %p1408 = pneg %p105
        $region46: #{tpu_custom_call.1} parent=31 // pred_check_branch
          %1410 = sbr.rel (%p1408) target = $region48
        $region47: #{tpu_custom_call.1} parent=31 // pred_region
          %s1412 = ssub.s32 768, 768
          %1413 = vsyncadd %s1404, %s1412
          %s1414 = smul.addr %s19, 6
          %s1415 = smul.addr %s1414, 128
          %s1416 = scalar_lea.hbm %s3, %s1415
          %s1418 = sshll.u32 %s1407, 4
          %s1419 = int_to_ptr.vmem [resolvable:$true] %s1418
          %1421 = dma.vmem_to_hbm [thread:$0]  %s1419, 768, %s1416, %s1404
        $region48: #{tpu_custom_call.1} parent=31 // pred_fallthru
          _
      $region32: #{tpu_custom_call.1} parent=5 // pred_fallthru
        _
      %p1422 = scmp.le.s32.totalorder 2, %s14
      // Predicated region
      $region49: #{tpu_custom_call.1} parent=5 // pred_check
        %p1423 = pneg %p1422
      $region50: #{tpu_custom_call.1} parent=5 // pred_check_branch
        %1425 = sbr.rel (%p1423) target = $region52
      $region51: #{tpu_custom_call.1} parent=5 // pred_region
        %s1426 = ssub.s32 %s14, 2
        // Predicated region
        $region53: #{tpu_custom_call.1} parent=51 // pred_check
          %p1427 = pneg %p111
        $region54: #{tpu_custom_call.1} parent=51 // pred_check_branch
          %1429 = sbr.rel (%p1427) target = $region56
        $region55: #{tpu_custom_call.1} parent=51 // pred_region
          %s1430 = sand.u32 %s96, 1
          %s1431 = scalar_lea.sflag [#allocation4], %s1430
          %s1432 = sand.u32 %s96, 1
          %s1433 = smul.addr %s1432, 48
          %s1434 = scalar_lea.vmem [#allocation8], %s1433
          %1435 = dma.done %s1431, 768
        $region56: #{tpu_custom_call.1} parent=51 // pred_fallthru
          _
      $region52: #{tpu_custom_call.1} parent=5 // pred_fallthru
        _
    $region6: #{tpu_custom_call.1} parent=1 // loop_footer
      %s18 = sadd.s32 1, %s14
    $region7: #{tpu_custom_call.1} parent=1 // loop_footer_branch
      %13 = sbr.rel target = $region3
    $region8: #{tpu_custom_call.1} parent=1 // loop_exit
      _
    %1436 = vsyncpa [#allocation3], 1
    %s1437 = scalar_lea.sflag [#allocation3], 1
    %1438 = vsyncpa %s1437, 1
    %1439 = vsyncpa [#allocation6], 1
    %1440 = vsyncpa [#allocation4], 1
    %s1441 = scalar_lea.sflag [#allocation4], 1
    %1442 = vsyncpa %s1441, 1

</llo_original>
